<compile_context>
chip_gen: v6e
topology: v6e:2x2x1
jax: 0.10.0
libtpu: 0.0.40
codegen_flags: <defaults>
</compile_context>

<pallas_src>
import functools

import jax
import jax.numpy as jnp
from jax.experimental import pallas as pl
from jax.experimental.pallas import tpu as pltpu


def _pick_tile(p, max_tile=4096):
    """Largest lane tile (multiple of 128) dividing p, else the full axis."""
    for t in (4096, 2048, 1024, 512, 256, 128):
        if t <= max_tile and p % t == 0:
            return t
    return p  # block == full dim is always legal


# --------------------------------------------------------------------------
# Detection kernel: anchor<->GT assignment (BEV IoU) + focal cls + smooth-L1
# reg + BCE objectness, reduced to partial sums per anchor-set.
# --------------------------------------------------------------------------
def _detection_kernel(gt_ref, boxes_ref, scores_ref, obj_ref, out_ref):
    # gt_ref:     (16, G) f32 VMEM; rows 0-6 box params, 7-10 [bx1,by1,-bx2,-by2],
    #             11 area2, 12 valid, 13 label, 14-15 pad.
    # boxes_ref:  (1, 7, T) f32 VMEM
    # scores_ref: (1, C, T) f32 VMEM
    # obj_ref:    (1, 1, T) f32 VMEM
    # out_ref:    (1, 8, 128) f32 VMEM accumulator (resident across pixel tiles)
    G = gt_ref.shape[1]

    b = boxes_ref[0]                                  # (7, T)
    xy = b[0:2, :]                                    # (2, T)
    wl = b[3:5, :]                                    # (2, T)
    c1 = xy - 0.5 * wl                                # [ax1; ay1]
    c2 = xy + 0.5 * wl                                # [ax2; ay2]
    d = c2 - c1
    area1 = d[0:1, :] * d[1:2, :]                     # (1, T)
    pstack = jnp.concatenate([c1, -c2], axis=0)       # (4, T)

    max_iou = jnp.full_like(area1, -1.0)              # (1, T)
    assigned = jnp.zeros_like(b)                      # (7, T)
    assigned_label = jnp.zeros_like(area1)            # (1, T)

    for g in range(G):
        box_col = gt_ref[0:7, g:g + 1]                # (7, 1)
        q_g = gt_ref[7:11, g:g + 1]                   # (4, 1)
        area2 = gt_ref[11:12, g:g + 1]                # (1, 1)
        valid_g = gt_ref[12:13, g:g + 1]              # (1, 1)
        label_g = gt_ref[13:14, g:g + 1]              # (1, 1)

        m4 = jnp.maximum(pstack, q_g)                 # (4, T)
        ix = jnp.maximum(-(m4[0:1, :] + m4[2:3, :]), 0.0)
        iy = jnp.maximum(-(m4[1:2, :] + m4[3:4, :]), 0.0)
        inter = ix * iy
        union = area1 + area2 - inter
        iou = inter * pl.reciprocal(union + 1e-6, approx=True)
        iou = jnp.where(valid_g > 0.5, iou, -1.0)

        upd = iou > max_iou                           # strict > keeps first argmax
        assigned = jnp.where(upd, box_col, assigned)              # (7, T)
        assigned_label = jnp.where(upd, label_g, assigned_label)  # (1, T)
        max_iou = jnp.where(upd, iou, max_iou)

    pos = (max_iou >= 0.6).astype(jnp.float32)        # (1, T)
    neg = (max_iou <= 0.4).astype(jnp.float32)
    valid = jnp.maximum(pos, neg)

    # ------ focal classification loss over all C classes at once ------
    logits = scores_ref[0]                            # (C, T)
    cls_id = jax.lax.broadcasted_iota(jnp.int32, logits.shape, 0).astype(jnp.float32)
    tgt = (cls_id == assigned_label).astype(jnp.float32) * pos    # (C, T)
    e = jnp.exp(-jnp.abs(logits))                     # single exp, reused
    inv1pe = pl.reciprocal(1.0 + e, approx=True)
    bce = jnp.maximum(logits, 0.0) - logits * tgt + jnp.log(1.0 + e)
    p = jnp.where(logits >= 0.0, inv1pe, e * inv1pe)  # sigmoid (stable)
    pt = jnp.where(tgt == 1.0, p, 1.0 - p)
    focal = jnp.where(tgt == 1.0, 0.25, 0.75) * (1.0 - pt) ** 2 * bce
    cls_sum = jnp.sum(focal * valid)
    valid_cnt = jnp.sum(valid)

    # ------ smooth-L1 regression over all 7 box params at once ------
    diff = b - assigned
    ad = jnp.abs(diff)
    sl1 = jnp.where(ad < 1.0, 0.5 * diff * diff, ad - 0.5)
    reg_sum = jnp.sum(sl1 * pos)
    pos_cnt = jnp.sum(pos)

    # ------ objectness BCE (sum over valid anchors) ------
    xo = obj_ref[0]                                   # (1, T)
    eo = jnp.exp(-jnp.abs(xo))
    bce_o = jnp.maximum(xo, 0.0) - xo * pos + jnp.log(1.0 + eo)
    obj_sum = jnp.sum(bce_o * valid)

    row = jax.lax.broadcasted_iota(jnp.int32, out_ref.shape, 1)   # (1, 8, 128)
    vals = (jnp.where(row == 0, cls_sum, 0.0)
            + jnp.where(row == 1, valid_cnt, 0.0)
            + jnp.where(row == 2, reg_sum, 0.0)
            + jnp.where(row == 3, pos_cnt, 0.0)
            + jnp.where(row == 4, obj_sum, 0.0))

    @pl.when(pl.program_id(1) == 0)
    def _init():
        out_ref[...] = jnp.zeros_like(out_ref)

    out_ref[...] += vals


# --------------------------------------------------------------------------
# Lane segmentation kernel: weighted CE + focal partial sums.
# --------------------------------------------------------------------------
def _lane_kernel(logits_ref, target_ref, out_ref, *, class_weights):
    C = logits_ref.shape[0]
    logits = logits_ref[...]                          # (C, T)
    tgt = target_ref[...]                             # (1, T) int32

    m = jnp.max(logits, axis=0, keepdims=True)        # (1, T)
    e = jnp.exp(logits - m)                           # (C, T)
    s = jnp.sum(e, axis=0, keepdims=True)
    lse = m + jnp.log(s)

    cls_id = jax.lax.broadcasted_iota(jnp.int32, logits.shape, 0)
    onehot = (cls_id == tgt).astype(jnp.float32)      # (C, T)

    crow = jax.lax.broadcasted_iota(jnp.int32, (C, 1), 0)
    w_col = jnp.zeros((C, 1), jnp.float32)
    for c, wv in enumerate(class_weights):
        w_col = jnp.where(crow == c, jnp.float32(wv), w_col)

    logit_true = jnp.sum(onehot * logits, axis=0, keepdims=True)
    w_pix = jnp.sum(onehot * w_col, axis=0, keepdims=True)
    nll = lse - logit_true
    ce_pix = w_pix * nll
    pt = jnp.sum(onehot * e, axis=0, keepdims=True) * pl.reciprocal(s, approx=True)
    focal_pix = (1.0 - pt) ** 2 * ce_pix

    row = jax.lax.broadcasted_iota(jnp.int32, out_ref.shape, 0)   # (8, 128)
    vals = (jnp.where(row == 0, jnp.sum(ce_pix), 0.0)
            + jnp.where(row == 1, jnp.sum(w_pix), 0.0)
            + jnp.where(row == 2, jnp.sum(focal_pix), 0.0))

    @pl.when(pl.program_id(0) == 0)
    def _init():
        out_ref[...] = jnp.zeros_like(out_ref)

    out_ref[...] += vals


# --------------------------------------------------------------------------
# Occupancy kernel: weighted CE (vs. argmax of GT) + soft-IoU partial sums.
# --------------------------------------------------------------------------
def _occupancy_kernel(logits_ref, gt_ref, out_ref, *, class_weights):
    C = logits_ref.shape[0]
    logits = logits_ref[...]                          # (C, T)
    gt = gt_ref[...]                                  # (C, T)

    # argmax over channels (first max wins, matches torch.argmax)
    best = jnp.max(gt, axis=0, keepdims=True)
    cls_f = jax.lax.broadcasted_iota(jnp.int32, gt.shape, 0).astype(jnp.float32)
    lab = jnp.min(jnp.where(gt >= best, cls_f, jnp.float32(C)),
                  axis=0, keepdims=True)              # (1, T)

    m = jnp.max(logits, axis=0, keepdims=True)
    e = jnp.exp(logits - m)
    s = jnp.sum(e, axis=0, keepdims=True)
    inv_s = pl.reciprocal(s, approx=True)
    lse = m + jnp.log(s)

    onehot = (cls_f == lab).astype(jnp.float32)       # (C, T)
    crow = jax.lax.broadcasted_iota(jnp.int32, (C, 1), 0)
    w_col = jnp.zeros((C, 1), jnp.float32)
    for c, wv in enumerate(class_weights):
        w_col = jnp.where(crow == c, jnp.float32(wv), w_col)
    logit_true = jnp.sum(onehot * logits, axis=0, keepdims=True)
    w_pix = jnp.sum(onehot * w_col, axis=0, keepdims=True)
    ce_sum = jnp.sum(w_pix * (lse - logit_true))
    w_sum = jnp.sum(w_pix)

    # soft-IoU partial sums per class (finished in the wrapper)
    p = e * inv_s                                     # softmax, (C, T)
    inter_v = jnp.sum(p * gt, axis=1, keepdims=True)  # (C, 1)
    psum_v = jnp.sum(p, axis=1, keepdims=True)        # (C, 1)
    tsum_v = jnp.sum(gt, axis=1, keepdims=True)       # (C, 1)

    rows = out_ref.shape[0]
    pieces = [jnp.zeros((2, 1), jnp.float32), inter_v, psum_v, tsum_v]
    rem = rows - 2 - 3 * C
    if rem > 0:
        pieces.append(jnp.zeros((rem, 1), jnp.float32))
    col = jnp.concatenate(pieces, axis=0)             # (rows, 1)

    row = jax.lax.broadcasted_iota(jnp.int32, out_ref.shape, 0)
    vals = (jnp.where(row == 0, ce_sum, 0.0)
            + jnp.where(row == 1, w_sum, 0.0)
            + col)

    @pl.when(pl.program_id(0) == 0)
    def _init():
        out_ref[...] = jnp.zeros_like(out_ref)

    out_ref[...] += vals


# --------------------------------------------------------------------------
# Wrappers (layout plumbing + final scalar normalizations)
# --------------------------------------------------------------------------
def detection_loss(pred_boxes, pred_scores, pred_objectness, gt_boxes, gt_labels):
    A, H, W, _ = pred_boxes.shape
    C = pred_scores.shape[1]
    P = H * W
    N = gt_boxes.shape[0]

    if N == 0:  # static branch, mirrors the torch len(gt_boxes)==0 path
        zero = jnp.float32(0.0)
        obj_loss = jnp.mean(pred_objectness.astype(jnp.float32))
        return {'total_loss': obj_loss, 'cls_loss': zero,
                'reg_loss': zero, 'obj_loss': obj_loss}

    # scores / objectness: pure reshapes (no HBM relayout); only the small
    # 7-channel box tensor is transposed to channel-first.
    boxes_t = jnp.transpose(pred_boxes.reshape(A, P, 7), (0, 2, 1)).astype(jnp.float32)
    scores_t = pred_scores.reshape(A, C, P).astype(jnp.float32)
    obj_t = pred_objectness.reshape(A, 1, P).astype(jnp.float32)

    gt = gt_boxes.astype(jnp.float32)                 # (N, 7)
    bx1 = gt[:, 0] - 0.5 * gt[:, 3]
    by1 = gt[:, 1] - 0.5 * gt[:, 4]
    bx2 = gt[:, 0] + 0.5 * gt[:, 3]
    by2 = gt[:, 1] + 0.5 * gt[:, 4]
    area2 = (bx2 - bx1) * (by2 - by1)
    gt_pack = jnp.concatenate([
        gt.T,                                          # rows 0-6: box params
        jnp.stack([bx1, by1, -bx2, -by2], axis=0),     # rows 7-10: BEV corners
        area2[None, :],                                # row 11
        jnp.ones((1, N), jnp.float32),                 # row 12: valid
        gt_labels.astype(jnp.float32)[None, :],        # row 13: label
        jnp.zeros((2, N), jnp.float32),                # rows 14-15: pad
    ], axis=0)                                         # (16, N)

    tile = _pick_tile(P)
    t_grid = P // tile

    out = pl.pallas_call(
        _detection_kernel,
        out_shape=jax.ShapeDtypeStruct((A, 8, 128), jnp.float32),
        grid_spec=pltpu.PrefetchScalarGridSpec(
            num_scalar_prefetch=0,
            grid=(A, t_grid),
            in_specs=[
                pl.BlockSpec((16, N), lambda a, t: (0, 0)),
                pl.BlockSpec((1, 7, tile), lambda a, t: (a, 0, t)),
                pl.BlockSpec((1, C, tile), lambda a, t: (a, 0, t)),
                pl.BlockSpec((1, 1, tile), lambda a, t: (a, 0, t)),
            ],
            out_specs=pl.BlockSpec((1, 8, 128), lambda a, t: (a, 0, 0)),
        ),
        compiler_params=pltpu.CompilerParams(
            dimension_semantics=("parallel", "arbitrary")),
    )(gt_pack, boxes_t, scores_t, obj_t)

    sums = jnp.sum(out[:, :, 0], axis=0)               # (8,)
    cls_sum, valid_cnt, reg_sum, pos_cnt, obj_sum = (
        sums[0], sums[1], sums[2], sums[3], sums[4])
    cls_loss = cls_sum / (valid_cnt + 1e-6)
    reg_loss = jnp.where(pos_cnt > 0, reg_sum / jnp.maximum(pos_cnt * 7.0, 1.0), 0.0)
    obj_loss = jnp.where(valid_cnt > 0, obj_sum / jnp.maximum(valid_cnt, 1.0), 0.0)
    total = 1.0 * cls_loss + 2.0 * reg_loss + 1.0 * obj_loss
    return {'total_loss': total, 'cls_loss': cls_loss,
            'reg_loss': reg_loss, 'obj_loss': obj_loss}


def lane_loss(pred_lane_seg, gt_lane_seg, num_classes):
    if gt_lane_seg is None:
        zero = jnp.float32(0.0)
        return {'total_loss': zero, 'seg_loss': zero}
    C, H, W = pred_lane_seg.shape
    P = H * W
    class_weights = tuple(0.1 if c == 0 else 1.0 for c in range(C))
    logits = pred_lane_seg.reshape(C, P).astype(jnp.float32)
    target = gt_lane_seg.reshape(1, P).astype(jnp.int32)

    tile = _pick_tile(P)
    t_grid = P // tile

    out = pl.pallas_call(
        functools.partial(_lane_kernel, class_weights=class_weights),
        out_shape=jax.ShapeDtypeStruct((8, 128), jnp.float32),
        grid_spec=pltpu.PrefetchScalarGridSpec(
            num_scalar_prefetch=0,
            grid=(t_grid,),
            in_specs=[pl.BlockSpec((C, tile), lambda t: (0, t)),
                      pl.BlockSpec((1, tile), lambda t: (0, t))],
            out_specs=pl.BlockSpec((8, 128), lambda t: (0, 0)),
        ),
        compiler_params=pltpu.CompilerParams(dimension_semantics=("arbitrary",)),
    )(logits, target)

    res = out[:, 0]
    ce = res[0] / res[1]
    focal = res[2] / jnp.float32(P)
    total = 0.7 * ce + 0.3 * focal
    return {'total_loss': total, 'seg_loss': total}


def occupancy_loss(pred_occupancy, gt_occupancy, num_classes):
    if gt_occupancy is None:
        zero = jnp.float32(0.0)
        return {'total_loss': zero, 'seg_loss': zero}
    C, H, W = pred_occupancy.shape
    P = H * W
    base_w = (1.0, 2.0, 0.5)
    class_weights = tuple(base_w[c] if c < len(base_w) else 1.0 for c in range(C))
    logits = pred_occupancy.reshape(C, P).astype(jnp.float32)
    gt = gt_occupancy.reshape(C, P).astype(jnp.float32)

    tile = _pick_tile(P)
    t_grid = P // tile
    rows = ((2 + 3 * C + 7) // 8) * 8                  # sublane-aligned partials

    out = pl.pallas_call(
        functools.partial(_occupancy_kernel, class_weights=class_weights),
        out_shape=jax.ShapeDtypeStruct((rows, 128), jnp.float32),
        grid_spec=pltpu.PrefetchScalarGridSpec(
            num_scalar_prefetch=0,
            grid=(t_grid,),
            in_specs=[pl.BlockSpec((C, tile), lambda t: (0, t)),
                      pl.BlockSpec((C, tile), lambda t: (0, t))],
            out_specs=pl.BlockSpec((rows, 128), lambda t: (0, 0)),
        ),
        compiler_params=pltpu.CompilerParams(dimension_semantics=("arbitrary",)),
    )(logits, gt)

    res = out[:, 0]
    ce = res[0] / res[1]
    inter = res[2:2 + C]
    psum = res[2 + C:2 + 2 * C]
    tsum = res[2 + 2 * C:2 + 3 * C]
    iou = inter / (psum + tsum - inter + 1e-6)
    iou_loss = jnp.mean(1.0 - iou)
    total = 0.6 * ce + 0.4 * iou_loss
    return {'total_loss': total, 'seg_loss': total}


def multi_task_loss(predictions, targets, task_weights, config, num_valid_cameras=6):
    loss_weights = config['training']['loss_weights']
    cam_dropout = config['training']['augmentation'].get('camera_dropout_prob', 0.0)

    det = detection_loss(predictions['boxes_3d'], predictions['scores'],
                         predictions['objectness'],
                         targets['boxes_3d'], targets['labels'])
    lane = lane_loss(predictions['lane_seg'], targets.get('lane_seg', None),
                     config['model']['lane_seg_head']['num_classes'])
    occ = occupancy_loss(predictions['occupancy'], targets.get('occupancy', None),
                         config['model']['occupancy_head']['num_classes'])

    tw = jax.nn.softmax(task_weights)
    camera_compensation = 1.0 + (6 - num_valid_cameras) * cam_dropout

    weighted_det = tw[0] * camera_compensation * det['total_loss']
    weighted_lane = tw[1] * loss_weights['lane_seg'] * lane['total_loss']
    weighted_occ = tw[2] * loss_weights['occupancy'] * occ['total_loss']
    total = weighted_det + weighted_lane + weighted_occ

    return {'total_loss': total,
            'detection_loss': weighted_det,
            'lane_loss': weighted_lane,
            'occupancy_loss': weighted_occ,
            'det_cls_loss': det['cls_loss'],
            'det_reg_loss': det['reg_loss'],
            'det_obj_loss': det['obj_loss'],
            'lane_seg_loss': lane['seg_loss'],
            'occupancy_seg_loss': occ['seg_loss'],
            'task_weights': tw,
            'camera_compensation': jnp.float32(camera_compensation)}


if __name__ == "__main__":
    key = jax.random.PRNGKey(0)
    A, H, W = 2, 16, 16
    C_DET, C_LANE, C_OCC = 4, 4, 3

    config = {
        'model': {'detection_head': {'num_classes': C_DET},
                  'lane_seg_head': {'num_classes': C_LANE},
                  'occupancy_head': {'num_classes': C_OCC}},
        'training': {'loss_weights': {'detection': 1.0, 'lane_seg': 0.5,
                                      'occupancy': 0.5},
                     'augmentation': {'camera_dropout_prob': 0.1}},
    }

    ks = jax.random.split(key, 10)
    xy = jax.random.uniform(ks[0], (A, H, W, 2), minval=0.0, maxval=20.0)
    z = jax.random.uniform(ks[1], (A, H, W, 1), minval=-1.0, maxval=1.0)
    wlh = jax.random.uniform(ks[2], (A, H, W, 3), minval=1.0, maxval=4.0)
    yaw = jax.random.uniform(ks[3], (A, H, W, 1), minval=-3.14, maxval=3.14)
    pred_boxes = jnp.concatenate([xy, z, wlh, yaw], axis=-1)          # (A,H,W,7)

    # GT boxes coincide with a few anchors so positive matches exist.
    gt_boxes = pred_boxes.reshape(-1, 7)[jnp.array([10, 200, 400])]    # (3,7)
    gt_labels = jnp.array([1, 2, 3], dtype=jnp.int32)

    pred_scores = jax.random.normal(ks[4], (A, C_DET, H, W))
    pred_objectness = jax.random.normal(ks[5], (A, H, W))

    lane_seg_pred = jax.random.normal(ks[6], (C_LANE, H, W))
    lane_seg_gt = jax.random.randint(ks[7], (H, W), 0, C_LANE)

    occ_pred = jax.random.normal(ks[8], (C_OCC, H, W))
    occ_gt = jax.nn.softmax(jax.random.normal(ks[9], (C_OCC, H, W)), axis=0)

    # nn.Parameter(torch.ones(3)) -> deterministic init
    task_weights = jnp.ones((3,), jnp.float32)

    predictions = {'boxes_3d': pred_boxes, 'scores': pred_scores,
                   'objectness': pred_objectness, 'lane_seg': lane_seg_pred,
                   'occupancy': occ_pred}
    targets = {'boxes_3d': gt_boxes, 'labels': gt_labels,
               'lane_seg': lane_seg_gt, 'occupancy': occ_gt}

    loss_dict = multi_task_loss(predictions, targets, task_weights, config,
                                num_valid_cameras=5)
    jax.block_until_ready(loss_dict['total_loss'])
    print("KERNEL_OK")
</pallas_src>

<mosaic_0001>
module attributes {stable_mosaic.version = 11 : i64} {
  func.func @_detection_kernel(%arg0: i32, %arg1: i32, %arg2: memref<16x3xf32, #tpu.memory_space<vmem>>, %arg3: memref<1x7x256xf32, #tpu.memory_space<vmem>>, %arg4: memref<1x4x256xf32, #tpu.memory_space<vmem>>, %arg5: memref<1x1x256xf32, #tpu.memory_space<vmem>>, %arg6: memref<1x8x128xf32, #tpu.memory_space<vmem>>) attributes {dimension_semantics = [#tpu.dimension_semantics<parallel>, #tpu.dimension_semantics<arbitrary>], iteration_bounds = array<i64: 2, 1>, scalar_prefetch = 0 : i64, scratch_operands = 0 : i64, tpu.core_type = #tpu.core_type<tc>, window_params = [{pipeline_mode = #tpu.pipeline_mode<synchronous>, transform_indices = @transform_0, window_bounds = array<i64: 16, 3>}, {transform_indices = @transform_1, window_bounds = array<i64: 1, 7, 256>}, {transform_indices = @transform_2, window_bounds = array<i64: 1, 4, 256>}, {transform_indices = @transform_3, window_bounds = array<i64: 1, 1, 256>}, {transform_indices = @transform_4, window_bounds = array<i64: 1, 8, 128>}]} {
    %c0 = arith.constant 0 : index
    %c0_0 = arith.constant 0 : index
    %c0_1 = arith.constant 0 : index
    %0 = vector.load %arg3[%c0, %c0_0, %c0_1] : memref<1x7x256xf32, #tpu.memory_space<vmem>>, vector<1x7x256xf32>
    %1 = vector.shape_cast %0 : vector<1x7x256xf32> to vector<7x256xf32>
    %2 = vector.extract_strided_slice %1 {offsets = [0, 0], sizes = [2, 256], strides = [1, 1]} : vector<7x256xf32> to vector<2x256xf32>
    %3 = vector.extract_strided_slice %1 {offsets = [3, 0], sizes = [2, 256], strides = [1, 1]} : vector<7x256xf32> to vector<2x256xf32>
    %cst = arith.constant 5.000000e-01 : f32
    %4 = vector.broadcast %cst : f32 to vector<2x256xf32>
    %5 = arith.mulf %4, %3 : vector<2x256xf32>
    %6 = arith.subf %2, %5 : vector<2x256xf32>
    %cst_2 = arith.constant 5.000000e-01 : f32
    %7 = vector.broadcast %cst_2 : f32 to vector<2x256xf32>
    %8 = arith.mulf %7, %3 : vector<2x256xf32>
    %9 = arith.addf %2, %8 : vector<2x256xf32>
    %10 = arith.subf %9, %6 : vector<2x256xf32>
    %11 = vector.extract_strided_slice %10 {offsets = [0, 0], sizes = [1, 256], strides = [1, 1]} : vector<2x256xf32> to vector<1x256xf32>
    %12 = vector.extract_strided_slice %10 {offsets = [1, 0], sizes = [1, 256], strides = [1, 1]} : vector<2x256xf32> to vector<1x256xf32>
    %13 = arith.mulf %11, %12 : vector<1x256xf32>
    %cst_3 = arith.constant 0.000000e+00 : f32
    %14 = vector.broadcast %cst_3 : f32 to vector<2x256xf32>
    %15 = arith.subf %14, %9 : vector<2x256xf32>
    %16 = tpu.concatenate %6, %15 in 0 : vector<2x256xf32>, vector<2x256xf32> -> vector<4x256xf32>
    %cst_4 = arith.constant -1.000000e+00 : f32
    %17 = vector.broadcast %cst_4 : f32 to vector<1x256xf32>
    %cst_5 = arith.constant 0.000000e+00 : f32
    %18 = vector.broadcast %cst_5 : f32 to vector<7x256xf32>
    %cst_6 = arith.constant 0.000000e+00 : f32
    %19 = vector.broadcast %cst_6 : f32 to vector<1x256xf32>
    %c0_7 = arith.constant 0 : index
    %c0_8 = arith.constant 0 : index
    %20 = vector.load %arg2[%c0_7, %c0_8] : memref<16x3xf32, #tpu.memory_space<vmem>>, vector<7x1xf32>
    %c7 = arith.constant 7 : index
    %c0_9 = arith.constant 0 : index
    %21 = vector.load %arg2[%c7, %c0_9] : memref<16x3xf32, #tpu.memory_space<vmem>>, vector<4x1xf32>
    %c11 = arith.constant 11 : index
    %c0_10 = arith.constant 0 : index
    %22 = vector.load %arg2[%c11, %c0_10] : memref<16x3xf32, #tpu.memory_space<vmem>>, vector<1x1xf32>
    %c12 = arith.constant 12 : index
    %c0_11 = arith.constant 0 : index
    %23 = vector.load %arg2[%c12, %c0_11] : memref<16x3xf32, #tpu.memory_space<vmem>>, vector<1x1xf32>
    %c13 = arith.constant 13 : index
    %c0_12 = arith.constant 0 : index
    %24 = vector.load %arg2[%c13, %c0_12] : memref<16x3xf32, #tpu.memory_space<vmem>>, vector<1x1xf32>
    %25 = vector.broadcast %21 : vector<4x1xf32> to vector<4x256xf32>
    %26 = arith.maximumf %16, %25 : vector<4x256xf32>
    %27 = vector.extract_strided_slice %26 {offsets = [0, 0], sizes = [1, 256], strides = [1, 1]} : vector<4x256xf32> to vector<1x256xf32>
    %28 = vector.extract_strided_slice %26 {offsets = [2, 0], sizes = [1, 256], strides = [1, 1]} : vector<4x256xf32> to vector<1x256xf32>
    %29 = arith.addf %27, %28 : vector<1x256xf32>
    %cst_13 = arith.constant 0.000000e+00 : f32
    %30 = vector.broadcast %cst_13 : f32 to vector<1x256xf32>
    %31 = arith.subf %30, %29 : vector<1x256xf32>
    %cst_14 = arith.constant 0.000000e+00 : f32
    %32 = vector.broadcast %cst_14 : f32 to vector<1x256xf32>
    %33 = arith.maximumf %31, %32 : vector<1x256xf32>
    %34 = vector.extract_strided_slice %26 {offsets = [1, 0], sizes = [1, 256], strides = [1, 1]} : vector<4x256xf32> to vector<1x256xf32>
    %35 = vector.extract_strided_slice %26 {offsets = [3, 0], sizes = [1, 256], strides = [1, 1]} : vector<4x256xf32> to vector<1x256xf32>
    %36 = arith.addf %34, %35 : vector<1x256xf32>
    %cst_15 = arith.constant 0.000000e+00 : f32
    %37 = vector.broadcast %cst_15 : f32 to vector<1x256xf32>
    %38 = arith.subf %37, %36 : vector<1x256xf32>
    %cst_16 = arith.constant 0.000000e+00 : f32
    %39 = vector.broadcast %cst_16 : f32 to vector<1x256xf32>
    %40 = arith.maximumf %38, %39 : vector<1x256xf32>
    %41 = arith.mulf %33, %40 : vector<1x256xf32>
    %42 = vector.broadcast %22 : vector<1x1xf32> to vector<1x256xf32>
    %43 = arith.addf %13, %42 : vector<1x256xf32>
    %44 = arith.subf %43, %41 : vector<1x256xf32>
    %cst_17 = arith.constant 9.99999997E-7 : f32
    %45 = vector.broadcast %cst_17 : f32 to vector<1x256xf32>
    %46 = arith.addf %44, %45 : vector<1x256xf32>
    %47 = tpu.reciprocal %46 {approx = true} : vector<1x256xf32> -> vector<1x256xf32>
    %48 = arith.mulf %41, %47 : vector<1x256xf32>
    %cst_18 = arith.constant 5.000000e-01 : f32
    %49 = vector.broadcast %cst_18 : f32 to vector<1x1xf32>
    %50 = arith.cmpf ogt, %23, %49 : vector<1x1xf32>
    %cst_19 = arith.constant -1.000000e+00 : f32
    %51 = vector.shape_cast %50 : vector<1x1xi1> to vector<1x1xi1>
    %52 = vector.broadcast %51 : vector<1x1xi1> to vector<1x256xi1>
    %53 = vector.broadcast %cst_19 : f32 to vector<1x256xf32>
    %54 = arith.select %52, %48, %53 : vector<1x256xi1>, vector<1x256xf32>
    %55 = arith.cmpf ogt, %54, %17 : vector<1x256xf32>
    %56 = vector.shape_cast %55 : vector<1x256xi1> to vector<1x256xi1>
    %57 = vector.broadcast %56 : vector<1x256xi1> to vector<7x256xi1>
    %58 = vector.shape_cast %20 : vector<7x1xf32> to vector<7x1xf32>
    %59 = vector.broadcast %58 : vector<7x1xf32> to vector<7x256xf32>
    %60 = arith.select %57, %59, %18 : vector<7x256xi1>, vector<7x256xf32>
    %61 = vector.shape_cast %24 : vector<1x1xf32> to vector<1x1xf32>
    %62 = vector.broadcast %61 : vector<1x1xf32> to vector<1x256xf32>
    %63 = arith.select %55, %62, %19 : vector<1x256xi1>, vector<1x256xf32>
    %64 = arith.select %55, %54, %17 : vector<1x256xi1>, vector<1x256xf32>
    %c0_20 = arith.constant 0 : index
    %c1 = arith.constant 1 : index
    %65 = vector.load %arg2[%c0_20, %c1] : memref<16x3xf32, #tpu.memory_space<vmem>>, vector<7x1xf32>
    %c7_21 = arith.constant 7 : index
    %c1_22 = arith.constant 1 : index
    %66 = vector.load %arg2[%c7_21, %c1_22] : memref<16x3xf32, #tpu.memory_space<vmem>>, vector<4x1xf32>
    %c11_23 = arith.constant 11 : index
    %c1_24 = arith.constant 1 : index
    %67 = vector.load %arg2[%c11_23, %c1_24] : memref<16x3xf32, #tpu.memory_space<vmem>>, vector<1x1xf32>
    %c12_25 = arith.constant 12 : index
    %c1_26 = arith.constant 1 : index
    %68 = vector.load %arg2[%c12_25, %c1_26] : memref<16x3xf32, #tpu.memory_space<vmem>>, vector<1x1xf32>
    %c13_27 = arith.constant 13 : index
    %c1_28 = arith.constant 1 : index
    %69 = vector.load %arg2[%c13_27, %c1_28] : memref<16x3xf32, #tpu.memory_space<vmem>>, vector<1x1xf32>
    %70 = vector.broadcast %66 : vector<4x1xf32> to vector<4x256xf32>
    %71 = arith.maximumf %16, %70 : vector<4x256xf32>
    %72 = vector.extract_strided_slice %71 {offsets = [0, 0], sizes = [1, 256], strides = [1, 1]} : vector<4x256xf32> to vector<1x256xf32>
    %73 = vector.extract_strided_slice %71 {offsets = [2, 0], sizes = [1, 256], strides = [1, 1]} : vector<4x256xf32> to vector<1x256xf32>
    %74 = arith.addf %72, %73 : vector<1x256xf32>
    %cst_29 = arith.constant 0.000000e+00 : f32
    %75 = vector.broadcast %cst_29 : f32 to vector<1x256xf32>
    %76 = arith.subf %75, %74 : vector<1x256xf32>
    %cst_30 = arith.constant 0.000000e+00 : f32
    %77 = vector.broadcast %cst_30 : f32 to vector<1x256xf32>
    %78 = arith.maximumf %76, %77 : vector<1x256xf32>
    %79 = vector.extract_strided_slice %71 {offsets = [1, 0], sizes = [1, 256], strides = [1, 1]} : vector<4x256xf32> to vector<1x256xf32>
    %80 = vector.extract_strided_slice %71 {offsets = [3, 0], sizes = [1, 256], strides = [1, 1]} : vector<4x256xf32> to vector<1x256xf32>
    %81 = arith.addf %79, %80 : vector<1x256xf32>
    %cst_31 = arith.constant 0.000000e+00 : f32
    %82 = vector.broadcast %cst_31 : f32 to vector<1x256xf32>
    %83 = arith.subf %82, %81 : vector<1x256xf32>
    %cst_32 = arith.constant 0.000000e+00 : f32
    %84 = vector.broadcast %cst_32 : f32 to vector<1x256xf32>
    %85 = arith.maximumf %83, %84 : vector<1x256xf32>
    %86 = arith.mulf %78, %85 : vector<1x256xf32>
    %87 = vector.broadcast %67 : vector<1x1xf32> to vector<1x256xf32>
    %88 = arith.addf %13, %87 : vector<1x256xf32>
    %89 = arith.subf %88, %86 : vector<1x256xf32>
    %cst_33 = arith.constant 9.99999997E-7 : f32
    %90 = vector.broadcast %cst_33 : f32 to vector<1x256xf32>
    %91 = arith.addf %89, %90 : vector<1x256xf32>
    %92 = tpu.reciprocal %91 {approx = true} : vector<1x256xf32> -> vector<1x256xf32>
    %93 = arith.mulf %86, %92 : vector<1x256xf32>
    %cst_34 = arith.constant 5.000000e-01 : f32
    %94 = vector.broadcast %cst_34 : f32 to vector<1x1xf32>
    %95 = arith.cmpf ogt, %68, %94 : vector<1x1xf32>
    %cst_35 = arith.constant -1.000000e+00 : f32
    %96 = vector.shape_cast %95 : vector<1x1xi1> to vector<1x1xi1>
    %97 = vector.broadcast %96 : vector<1x1xi1> to vector<1x256xi1>
    %98 = vector.broadcast %cst_35 : f32 to vector<1x256xf32>
    %99 = arith.select %97, %93, %98 : vector<1x256xi1>, vector<1x256xf32>
    %100 = arith.cmpf ogt, %99, %64 : vector<1x256xf32>
    %101 = vector.shape_cast %100 : vector<1x256xi1> to vector<1x256xi1>
    %102 = vector.broadcast %101 : vector<1x256xi1> to vector<7x256xi1>
    %103 = vector.shape_cast %65 : vector<7x1xf32> to vector<7x1xf32>
    %104 = vector.broadcast %103 : vector<7x1xf32> to vector<7x256xf32>
    %105 = arith.select %102, %104, %60 : vector<7x256xi1>, vector<7x256xf32>
    %106 = vector.shape_cast %69 : vector<1x1xf32> to vector<1x1xf32>
    %107 = vector.broadcast %106 : vector<1x1xf32> to vector<1x256xf32>
    %108 = arith.select %100, %107, %63 : vector<1x256xi1>, vector<1x256xf32>
    %109 = arith.select %100, %99, %64 : vector<1x256xi1>, vector<1x256xf32>
    %c0_36 = arith.constant 0 : index
    %c2 = arith.constant 2 : index
    %110 = vector.load %arg2[%c0_36, %c2] : memref<16x3xf32, #tpu.memory_space<vmem>>, vector<7x1xf32>
    %c7_37 = arith.constant 7 : index
    %c2_38 = arith.constant 2 : index
    %111 = vector.load %arg2[%c7_37, %c2_38] : memref<16x3xf32, #tpu.memory_space<vmem>>, vector<4x1xf32>
    %c11_39 = arith.constant 11 : index
    %c2_40 = arith.constant 2 : index
    %112 = vector.load %arg2[%c11_39, %c2_40] : memref<16x3xf32, #tpu.memory_space<vmem>>, vector<1x1xf32>
    %c12_41 = arith.constant 12 : index
    %c2_42 = arith.constant 2 : index
    %113 = vector.load %arg2[%c12_41, %c2_42] : memref<16x3xf32, #tpu.memory_space<vmem>>, vector<1x1xf32>
    %c13_43 = arith.constant 13 : index
    %c2_44 = arith.constant 2 : index
    %114 = vector.load %arg2[%c13_43, %c2_44] : memref<16x3xf32, #tpu.memory_space<vmem>>, vector<1x1xf32>
    %115 = vector.broadcast %111 : vector<4x1xf32> to vector<4x256xf32>
    %116 = arith.maximumf %16, %115 : vector<4x256xf32>
    %117 = vector.extract_strided_slice %116 {offsets = [0, 0], sizes = [1, 256], strides = [1, 1]} : vector<4x256xf32> to vector<1x256xf32>
    %118 = vector.extract_strided_slice %116 {offsets = [2, 0], sizes = [1, 256], strides = [1, 1]} : vector<4x256xf32> to vector<1x256xf32>
    %119 = arith.addf %117, %118 : vector<1x256xf32>
    %cst_45 = arith.constant 0.000000e+00 : f32
    %120 = vector.broadcast %cst_45 : f32 to vector<1x256xf32>
    %121 = arith.subf %120, %119 : vector<1x256xf32>
    %cst_46 = arith.constant 0.000000e+00 : f32
    %122 = vector.broadcast %cst_46 : f32 to vector<1x256xf32>
    %123 = arith.maximumf %121, %122 : vector<1x256xf32>
    %124 = vector.extract_strided_slice %116 {offsets = [1, 0], sizes = [1, 256], strides = [1, 1]} : vector<4x256xf32> to vector<1x256xf32>
    %125 = vector.extract_strided_slice %116 {offsets = [3, 0], sizes = [1, 256], strides = [1, 1]} : vector<4x256xf32> to vector<1x256xf32>
    %126 = arith.addf %124, %125 : vector<1x256xf32>
    %cst_47 = arith.constant 0.000000e+00 : f32
    %127 = vector.broadcast %cst_47 : f32 to vector<1x256xf32>
    %128 = arith.subf %127, %126 : vector<1x256xf32>
    %cst_48 = arith.constant 0.000000e+00 : f32
    %129 = vector.broadcast %cst_48 : f32 to vector<1x256xf32>
    %130 = arith.maximumf %128, %129 : vector<1x256xf32>
    %131 = arith.mulf %123, %130 : vector<1x256xf32>
    %132 = vector.broadcast %112 : vector<1x1xf32> to vector<1x256xf32>
    %133 = arith.addf %13, %132 : vector<1x256xf32>
    %134 = arith.subf %133, %131 : vector<1x256xf32>
    %cst_49 = arith.constant 9.99999997E-7 : f32
    %135 = vector.broadcast %cst_49 : f32 to vector<1x256xf32>
    %136 = arith.addf %134, %135 : vector<1x256xf32>
    %137 = tpu.reciprocal %136 {approx = true} : vector<1x256xf32> -> vector<1x256xf32>
    %138 = arith.mulf %131, %137 : vector<1x256xf32>
    %cst_50 = arith.constant 5.000000e-01 : f32
    %139 = vector.broadcast %cst_50 : f32 to vector<1x1xf32>
    %140 = arith.cmpf ogt, %113, %139 : vector<1x1xf32>
    %cst_51 = arith.constant -1.000000e+00 : f32
    %141 = vector.shape_cast %140 : vector<1x1xi1> to vector<1x1xi1>
    %142 = vector.broadcast %141 : vector<1x1xi1> to vector<1x256xi1>
    %143 = vector.broadcast %cst_51 : f32 to vector<1x256xf32>
    %144 = arith.select %142, %138, %143 : vector<1x256xi1>, vector<1x256xf32>
    %145 = arith.cmpf ogt, %144, %109 : vector<1x256xf32>
    %146 = vector.shape_cast %145 : vector<1x256xi1> to vector<1x256xi1>
    %147 = vector.broadcast %146 : vector<1x256xi1> to vector<7x256xi1>
    %148 = vector.shape_cast %110 : vector<7x1xf32> to vector<7x1xf32>
    %149 = vector.broadcast %148 : vector<7x1xf32> to vector<7x256xf32>
    %150 = arith.select %147, %149, %105 : vector<7x256xi1>, vector<7x256xf32>
    %151 = vector.shape_cast %114 : vector<1x1xf32> to vector<1x1xf32>
    %152 = vector.broadcast %151 : vector<1x1xf32> to vector<1x256xf32>
    %153 = arith.select %145, %152, %108 : vector<1x256xi1>, vector<1x256xf32>
    %154 = arith.select %145, %144, %109 : vector<1x256xi1>, vector<1x256xf32>
    %cst_52 = arith.constant 6.000000e-01 : f32
    %155 = vector.broadcast %cst_52 : f32 to vector<1x256xf32>
    %156 = arith.cmpf oge, %154, %155 : vector<1x256xf32>
    %157 = arith.extui %156 : vector<1x256xi1> to vector<1x256xi32>
    %158 = arith.sitofp %157 : vector<1x256xi32> to vector<1x256xf32>
    %cst_53 = arith.constant 4.000000e-01 : f32
    %159 = vector.broadcast %cst_53 : f32 to vector<1x256xf32>
    %160 = arith.cmpf ole, %154, %159 : vector<1x256xf32>
    %161 = arith.extui %160 : vector<1x256xi1> to vector<1x256xi32>
    %162 = arith.sitofp %161 : vector<1x256xi32> to vector<1x256xf32>
    %163 = arith.maximumf %158, %162 : vector<1x256xf32>
    %c0_54 = arith.constant 0 : index
    %c0_55 = arith.constant 0 : index
    %c0_56 = arith.constant 0 : index
    %164 = vector.load %arg4[%c0_54, %c0_55, %c0_56] : memref<1x4x256xf32, #tpu.memory_space<vmem>>, vector<1x4x256xf32>
    %165 = vector.shape_cast %164 : vector<1x4x256xf32> to vector<4x256xf32>
    %166 = tpu.iota {dimensions = array<i32: 0>} : vector<4x256xi32>
    %167 = arith.sitofp %166 : vector<4x256xi32> to vector<4x256xf32>
    %168 = vector.broadcast %153 : vector<1x256xf32> to vector<4x256xf32>
    %169 = arith.cmpf oeq, %167, %168 : vector<4x256xf32>
    %170 = arith.extui %169 : vector<4x256xi1> to vector<4x256xi32>
    %171 = arith.sitofp %170 : vector<4x256xi32> to vector<4x256xf32>
    %172 = vector.broadcast %158 : vector<1x256xf32> to vector<4x256xf32>
    %173 = arith.mulf %171, %172 : vector<4x256xf32>
    %174 = math.absf %165 : vector<4x256xf32>
    %cst_57 = arith.constant 0.000000e+00 : f32
    %175 = vector.broadcast %cst_57 : f32 to vector<4x256xf32>
    %176 = arith.subf %175, %174 : vector<4x256xf32>
    %177 = math.exp %176 : vector<4x256xf32>
    %cst_58 = arith.constant 1.000000e+00 : f32
    %178 = vector.broadcast %cst_58 : f32 to vector<4x256xf32>
    %179 = arith.addf %178, %177 : vector<4x256xf32>
    %180 = tpu.reciprocal %179 {approx = true} : vector<4x256xf32> -> vector<4x256xf32>
    %cst_59 = arith.constant 0.000000e+00 : f32
    %181 = vector.broadcast %cst_59 : f32 to vector<4x256xf32>
    %182 = arith.maximumf %165, %181 : vector<4x256xf32>
    %183 = arith.mulf %165, %173 : vector<4x256xf32>
    %184 = arith.subf %182, %183 : vector<4x256xf32>
    %cst_60 = arith.constant 1.000000e+00 : f32
    %185 = vector.broadcast %cst_60 : f32 to vector<4x256xf32>
    %186 = arith.addf %185, %177 : vector<4x256xf32>
    %187 = math.log %186 : vector<4x256xf32>
    %188 = arith.addf %184, %187 : vector<4x256xf32>
    %cst_61 = arith.constant 0.000000e+00 : f32
    %189 = vector.broadcast %cst_61 : f32 to vector<4x256xf32>
    %190 = arith.cmpf oge, %165, %189 : vector<4x256xf32>
    %191 = arith.mulf %177, %180 : vector<4x256xf32>
    %192 = arith.select %190, %180, %191 : vector<4x256xi1>, vector<4x256xf32>
    %cst_62 = arith.constant 1.000000e+00 : f32
    %193 = vector.broadcast %cst_62 : f32 to vector<4x256xf32>
    %194 = arith.cmpf oeq, %173, %193 : vector<4x256xf32>
    %cst_63 = arith.constant 1.000000e+00 : f32
    %195 = vector.broadcast %cst_63 : f32 to vector<4x256xf32>
    %196 = arith.subf %195, %192 : vector<4x256xf32>
    %197 = arith.select %194, %192, %196 : vector<4x256xi1>, vector<4x256xf32>
    %cst_64 = arith.constant 1.000000e+00 : f32
    %198 = vector.broadcast %cst_64 : f32 to vector<4x256xf32>
    %199 = arith.cmpf oeq, %173, %198 : vector<4x256xf32>
    %cst_65 = arith.constant 2.500000e-01 : f32
    %cst_66 = arith.constant 7.500000e-01 : f32
    %200 = vector.broadcast %cst_65 : f32 to vector<4x256xf32>
    %201 = vector.broadcast %cst_66 : f32 to vector<4x256xf32>
    %202 = arith.select %199, %200, %201 : vector<4x256xi1>, vector<4x256xf32>
    %cst_67 = arith.constant 1.000000e+00 : f32
    %203 = vector.broadcast %cst_67 : f32 to vector<4x256xf32>
    %204 = arith.subf %203, %197 : vector<4x256xf32>
    %205 = arith.mulf %204, %204 : vector<4x256xf32>
    %206 = arith.mulf %202, %205 : vector<4x256xf32>
    %207 = arith.mulf %206, %188 : vector<4x256xf32>
    %208 = vector.broadcast %163 : vector<1x256xf32> to vector<4x256xf32>
    %209 = arith.mulf %207, %208 : vector<4x256xf32>
    %210 = vector.shape_cast %209 : vector<4x256xf32> to vector<1x4x256xf32>
    %cst_68 = arith.constant dense<0.000000e+00> : vector<1xf32>
    %211 = vector.multi_reduction <add>, %210, %cst_68 [1, 2] : vector<1x4x256xf32> to vector<1xf32>
    %212 = vector.shape_cast %211 : vector<1xf32> to vector<1x1x1xf32>
    %213 = vector.extract %212[0, 0, 0] : f32 from vector<1x1x1xf32>
    %214 = vector.shape_cast %163 : vector<1x256xf32> to vector<1x1x256xf32>
    %cst_69 = arith.constant dense<0.000000e+00> : vector<1xf32>
    %215 = vector.multi_reduction <add>, %214, %cst_69 [1, 2] : vector<1x1x256xf32> to vector<1xf32>
    %216 = vector.shape_cast %215 : vector<1xf32> to vector<1x1x1xf32>
    %217 = vector.extract %216[0, 0, 0] : f32 from vector<1x1x1xf32>
    %218 = arith.subf %1, %150 : vector<7x256xf32>
    %219 = math.absf %218 : vector<7x256xf32>
    %cst_70 = arith.constant 1.000000e+00 : f32
    %220 = vector.broadcast %cst_70 : f32 to vector<7x256xf32>
    %221 = arith.cmpf olt, %219, %220 : vector<7x256xf32>
    %cst_71 = arith.constant 5.000000e-01 : f32
    %222 = vector.broadcast %cst_71 : f32 to vector<7x256xf32>
    %223 = arith.mulf %222, %218 : vector<7x256xf32>
    %224 = arith.mulf %223, %218 : vector<7x256xf32>
    %cst_72 = arith.constant 5.000000e-01 : f32
    %225 = vector.broadcast %cst_72 : f32 to vector<7x256xf32>
    %226 = arith.subf %219, %225 : vector<7x256xf32>
    %227 = arith.select %221, %224, %226 : vector<7x256xi1>, vector<7x256xf32>
    %228 = vector.broadcast %158 : vector<1x256xf32> to vector<7x256xf32>
    %229 = arith.mulf %227, %228 : vector<7x256xf32>
    %230 = vector.shape_cast %229 : vector<7x256xf32> to vector<1x7x256xf32>
    %cst_73 = arith.constant dense<0.000000e+00> : vector<1xf32>
    %231 = vector.multi_reduction <add>, %230, %cst_73 [1, 2] : vector<1x7x256xf32> to vector<1xf32>
    %232 = vector.shape_cast %231 : vector<1xf32> to vector<1x1x1xf32>
    %233 = vector.extract %232[0, 0, 0] : f32 from vector<1x1x1xf32>
    %234 = vector.shape_cast %158 : vector<1x256xf32> to vector<1x1x256xf32>
    %cst_74 = arith.constant dense<0.000000e+00> : vector<1xf32>
    %235 = vector.multi_reduction <add>, %234, %cst_74 [1, 2] : vector<1x1x256xf32> to vector<1xf32>
    %236 = vector.shape_cast %235 : vector<1xf32> to vector<1x1x1xf32>
    %237 = vector.extract %236[0, 0, 0] : f32 from vector<1x1x1xf32>
    %c0_75 = arith.constant 0 : index
    %c0_76 = arith.constant 0 : index
    %c0_77 = arith.constant 0 : index
    %238 = vector.load %arg5[%c0_75, %c0_76, %c0_77] : memref<1x1x256xf32, #tpu.memory_space<vmem>>, vector<1x1x256xf32>
    %239 = vector.shape_cast %238 : vector<1x1x256xf32> to vector<1x256xf32>
    %240 = math.absf %239 : vector<1x256xf32>
    %cst_78 = arith.constant 0.000000e+00 : f32
    %241 = vector.broadcast %cst_78 : f32 to vector<1x256xf32>
    %242 = arith.subf %241, %240 : vector<1x256xf32>
    %243 = math.exp %242 : vector<1x256xf32>
    %cst_79 = arith.constant 0.000000e+00 : f32
    %244 = vector.broadcast %cst_79 : f32 to vector<1x256xf32>
    %245 = arith.maximumf %239, %244 : vector<1x256xf32>
    %246 = arith.mulf %239, %158 : vector<1x256xf32>
    %247 = arith.subf %245, %246 : vector<1x256xf32>
    %cst_80 = arith.constant 1.000000e+00 : f32
    %248 = vector.broadcast %cst_80 : f32 to vector<1x256xf32>
    %249 = arith.addf %248, %243 : vector<1x256xf32>
    %250 = math.log %249 : vector<1x256xf32>
    %251 = arith.addf %247, %250 : vector<1x256xf32>
    %252 = arith.mulf %251, %163 : vector<1x256xf32>
    %253 = vector.shape_cast %252 : vector<1x256xf32> to vector<1x1x256xf32>
    %cst_81 = arith.constant dense<0.000000e+00> : vector<1xf32>
    %254 = vector.multi_reduction <add>, %253, %cst_81 [1, 2] : vector<1x1x256xf32> to vector<1xf32>
    %255 = vector.shape_cast %254 : vector<1xf32> to vector<1x1x1xf32>
    %256 = vector.extract %255[0, 0, 0] : f32 from vector<1x1x1xf32>
    %257 = tpu.iota {dimensions = array<i32: 1>} : vector<1x8x128xi32>
    %c0_i32 = arith.constant 0 : i32
    %258 = vector.broadcast %c0_i32 : i32 to vector<1x8x128xi32>
    %259 = arith.cmpi eq, %257, %258 : vector<1x8x128xi32>
    %cst_82 = arith.constant 0.000000e+00 : f32
    %260 = vector.broadcast %213 : f32 to vector<1x8x128xf32>
    %261 = vector.broadcast %cst_82 : f32 to vector<1x8x128xf32>
    %262 = arith.select %259, %260, %261 : vector<1x8x128xi1>, vector<1x8x128xf32>
    %c1_i32 = arith.constant 1 : i32
    %263 = vector.broadcast %c1_i32 : i32 to vector<1x8x128xi32>
    %264 = arith.cmpi eq, %257, %263 : vector<1x8x128xi32>
    %cst_83 = arith.constant 0.000000e+00 : f32
    %265 = vector.broadcast %217 : f32 to vector<1x8x128xf32>
    %266 = vector.broadcast %cst_83 : f32 to vector<1x8x128xf32>
    %267 = arith.select %264, %265, %266 : vector<1x8x128xi1>, vector<1x8x128xf32>
    %268 = arith.addf %262, %267 : vector<1x8x128xf32>
    %c2_i32 = arith.constant 2 : i32
    %269 = vector.broadcast %c2_i32 : i32 to vector<1x8x128xi32>
    %270 = arith.cmpi eq, %257, %269 : vector<1x8x128xi32>
    %cst_84 = arith.constant 0.000000e+00 : f32
    %271 = vector.broadcast %233 : f32 to vector<1x8x128xf32>
    %272 = vector.broadcast %cst_84 : f32 to vector<1x8x128xf32>
    %273 = arith.select %270, %271, %272 : vector<1x8x128xi1>, vector<1x8x128xf32>
    %274 = arith.addf %268, %273 : vector<1x8x128xf32>
    %c3_i32 = arith.constant 3 : i32
    %275 = vector.broadcast %c3_i32 : i32 to vector<1x8x128xi32>
    %276 = arith.cmpi eq, %257, %275 : vector<1x8x128xi32>
    %cst_85 = arith.constant 0.000000e+00 : f32
    %277 = vector.broadcast %237 : f32 to vector<1x8x128xf32>
    %278 = vector.broadcast %cst_85 : f32 to vector<1x8x128xf32>
    %279 = arith.select %276, %277, %278 : vector<1x8x128xi1>, vector<1x8x128xf32>
    %280 = arith.addf %274, %279 : vector<1x8x128xf32>
    %c4_i32 = arith.constant 4 : i32
    %281 = vector.broadcast %c4_i32 : i32 to vector<1x8x128xi32>
    %282 = arith.cmpi eq, %257, %281 : vector<1x8x128xi32>
    %cst_86 = arith.constant 0.000000e+00 : f32
    %283 = vector.broadcast %256 : f32 to vector<1x8x128xf32>
    %284 = vector.broadcast %cst_86 : f32 to vector<1x8x128xf32>
    %285 = arith.select %282, %283, %284 : vector<1x8x128xi1>, vector<1x8x128xf32>
    %286 = arith.addf %280, %285 : vector<1x8x128xf32>
    %c0_i32_87 = arith.constant 0 : i32
    %287 = arith.cmpi eq, %arg1, %c0_i32_87 : i32
    %288 = arith.extui %287 : i1 to i32
    %c0_i32_88 = arith.constant 0 : i32
    %289 = arith.cmpi ne, %288, %c0_i32_88 : i32
    scf.if %289 {
      %cst_95 = arith.constant 0.000000e+00 : f32
      %293 = vector.broadcast %cst_95 : f32 to vector<1x8x128xf32>
      %c0_96 = arith.constant 0 : index
      %c0_97 = arith.constant 0 : index
      %c0_98 = arith.constant 0 : index
      %294 = vector.load %arg6[%c0_96, %c0_97, %c0_98] : memref<1x8x128xf32, #tpu.memory_space<vmem>>, vector<1x8x128xf32>
      tpu.vector_store %arg6[%c0_96, %c0_97, %c0_98], %293 {strides = array<i32>} : memref<1x8x128xf32, #tpu.memory_space<vmem>>, vector<1x8x128xf32>,
    } else {
    }
    %c0_89 = arith.constant 0 : index
    %c0_90 = arith.constant 0 : index
    %c0_91 = arith.constant 0 : index
    %290 = vector.load %arg6[%c0_89, %c0_90, %c0_91] : memref<1x8x128xf32, #tpu.memory_space<vmem>>, vector<1x8x128xf32>
    %291 = arith.addf %290, %286 : vector<1x8x128xf32>
    %c0_92 = arith.constant 0 : index
    %c0_93 = arith.constant 0 : index
    %c0_94 = arith.constant 0 : index
    %292 = vector.load %arg6[%c0_92, %c0_93, %c0_94] : memref<1x8x128xf32, #tpu.memory_space<vmem>>, vector<1x8x128xf32>
    tpu.vector_store %arg6[%c0_92, %c0_93, %c0_94], %291 {strides = array<i32>} : memref<1x8x128xf32, #tpu.memory_space<vmem>>, vector<1x8x128xf32>,
    return
  }
  func.func @transform_0(%arg0: i32, %arg1: i32) -> (i32, i32) {
    %c0_i32 = arith.constant 0 : i32
    %c0_i32_0 = arith.constant 0 : i32
    %c0_i32_1 = arith.constant 0 : i32
    return %c0_i32, %c0_i32_0 : i32, i32
  }
  func.func @transform_1(%arg0: i32, %arg1: i32) -> (i32, i32, i32) {
    %c0_i32 = arith.constant 0 : i32
    %c0_i32_0 = arith.constant 0 : i32
    return %arg0, %c0_i32, %arg1 : i32, i32, i32
  }
  func.func @transform_2(%arg0: i32, %arg1: i32) -> (i32, i32, i32) {
    %c0_i32 = arith.constant 0 : i32
    %c0_i32_0 = arith.constant 0 : i32
    return %arg0, %c0_i32, %arg1 : i32, i32, i32
  }
  func.func @transform_3(%arg0: i32, %arg1: i32) -> (i32, i32, i32) {
    %c0_i32 = arith.constant 0 : i32
    %c0_i32_0 = arith.constant 0 : i32
    return %arg0, %c0_i32, %arg1 : i32, i32, i32
  }
  func.func @transform_4(%arg0: i32, %arg1: i32) -> (i32, i32, i32) {
    %c0_i32 = arith.constant 0 : i32
    %c0_i32_0 = arith.constant 0 : i32
    %c0_i32_1 = arith.constant 0 : i32
    return %arg0, %c0_i32, %c0_i32_0 : i32, i32, i32
  }
}

</mosaic_0001>

<llo_original>
// kernel: tpu_custom_call.1
$region0: #{tpu_custom_call.1}
  #allocation0 [shape = 'u32[]', space=smem, size = 0x4, offset = 0x4, fixed_abs, tag = 'smem constant byte address 0x4 - core index']
  #allocation1 [shape = 'u32[144,128]{1,0:T(1,128)}', space=vmem, size = 0x12000, scoped, tag = 'internal scratch']
  %s0 = inlined_call_operand.vmem [shape: f32[16,3], index: 0, kind: input, shape index: {}]
  %s1 = inlined_call_operand.vmem [shape: f32[2,7,256], index: 1, kind: input, shape index: {}]
  %s2 = inlined_call_operand.vmem [shape: f32[2,4,256], index: 2, kind: input, shape index: {}]
  %s3 = inlined_call_operand.vmem [shape: f32[2,1,256], index: 3, kind: input, shape index: {}]
  %s4 = inlined_call_operand.hbm [shape: f32[2,8,128], index: 4, kind: output, shape index: {}]
  %s5 = sld [smem:[#allocation0]]
  $region53: #{tpu_custom_call.1} parent=0
    _
  %s7 = ssub.s32 1, %s5
  %s8 = scalar_select 0, %s7, %s5
  $region1: #{tpu_custom_call.1} parent=0
    #allocation2 [shape = 'u8[8192]{0}', space=vmem, size = 0x2000, scoped, tag = 'output window, operand 0']
    #allocation3 [shape = 's32[2]{0}', space=sflag, size = 0x8, scoped, tag = 'scoped memory for tpu_custom_call.1']
    %9 = vsyncpa [#allocation3], 0
    %s10 = scalar_lea.sflag [#allocation3], 1
    %11 = vsyncpa %s10, 0
    loop: start=0, step=1, limit=4
    $region2: #{tpu_custom_call.1} parent=1 // loop_pre_header
      _
    $region3: #{tpu_custom_call.1} parent=1 // loop_header
      %s13 = sphi 0, %s17
      %p14 = scmp.ge.s32.totalorder %s13, 4
      %s20 = sphi 0, %s32
      %s21 = sphi 0, %s28
      %s22 = sphi 0, %s20
      %s23 = sphi 0, %s21
      %s24 = sphi 0, %s22
      %s25 = sphi 0, %s23
      %s33 = sphi 0, %s33
      %s35 = sphi 0, %s33
      %s36 = sphi 0, %s35
      %s50 = sphi 0, %s36
      %s58 = sphi 0, %s60
      %s61 = sphi 0, %s58
      %s62 = sphi 0, %s61
      %s78 = sphi 0, %s62
      %s86 = sphi 0, %s88
      %s89 = sphi 0, %s86
      %s90 = sphi 0, %s89
      %s106 = sphi 0, %s90
      %s114 = sphi 0, %s116
      %s117 = sphi 0, %s114
      %s118 = sphi 0, %s117
      %s134 = sphi 0, %s118
      %s140 = sphi 0, %s142
      %s143 = sphi 0, %s140
      %s144 = sphi 0, %s143
      %s160 = sphi 0, %s144
    $region4: #{tpu_custom_call.1} parent=1 // loop_header_branch
      %16 = sbr.rel (%p14) target = $region8
    $region5: #{tpu_custom_call.1} parent=1 // loop_body
      %s18 = ssub.s32 %s13, 1
      %s19 = ssub.s32 %s13, 2
      %s26 = sadd.s32 1, %s21
      %p27 = scmp.ge.s32.totalorder %s26, 1
      %s28 = scalar_select %p27, 0, %s26
      %s29 = sadd.s32 1, %s20
      %s30 = scalar_select %p27, %s29, %s20
      %p31 = scmp.ge.s32.totalorder %s30, 2
      %s32 = scalar_select %p31, 0, %s30
      %s34 = sadd.s32 %s33, 1
      %p37 = scmp.eq.s32.totalorder %s13, 1
      %p38 = scmp.ne.s32.totalorder %s33, %s35
      %p39 = scmp.eq.s32.totalorder %s13, 0
      %p40 = por %p38, %p39
      %p41 = scmp.ne.s32.totalorder %s33, %s35
      %p42 = scmp.eq.s32.totalorder %s18, 1
      %p43 = por %p41, %p42
      %p44 = scmp.ne.s32.totalorder %s35, %s36
      %p45 = scmp.eq.s32.totalorder %s18, 0
      %p46 = por %p44, %p45
      %p47 = scmp.ne.s32.totalorder %s35, %s36
      %p48 = scmp.eq.s32.totalorder %s19, 1
      %p49 = por %p47, %p48
      %p51 = scmp.ne.s32.totalorder %s36, %s50
      %p52 = scmp.eq.s32.totalorder %s19, 0
      %p53 = por %p51, %p52
      %s54 = ssub.s32 %s20, %s32
      %s55 = ssub.s32 %s21, %s28
      %s56 = sor.u32 %s54, %s55
      %p57 = scmp.eq.s32.totalorder %s56, 0
      %s59 = sadd.s32 %s58, 1
      %s60 = scalar_select %p57, %s58, %s59
      %p63 = pneg %p57
      %p64 = scmp.eq.s32.totalorder %s13, 1
      %p65 = por %p63, %p64
      %p66 = scmp.ne.s32.totalorder %s58, %s61
      %p67 = scmp.eq.s32.totalorder %s13, 0
      %p68 = por %p66, %p67
      %p69 = scmp.ne.s32.totalorder %s58, %s61
      %p70 = scmp.eq.s32.totalorder %s18, 1
      %p71 = por %p69, %p70
      %p72 = scmp.ne.s32.totalorder %s61, %s62
      %p73 = scmp.eq.s32.totalorder %s18, 0
      %p74 = por %p72, %p73
      %p75 = scmp.ne.s32.totalorder %s61, %s62
      %p76 = scmp.eq.s32.totalorder %s19, 1
      %p77 = por %p75, %p76
      %p79 = scmp.ne.s32.totalorder %s62, %s78
      %p80 = scmp.eq.s32.totalorder %s19, 0
      %p81 = por %p79, %p80
      %s82 = ssub.s32 %s20, %s32
      %s83 = ssub.s32 %s21, %s28
      %s84 = sor.u32 %s82, %s83
      %p85 = scmp.eq.s32.totalorder %s84, 0
      %s87 = sadd.s32 %s86, 1
      %s88 = scalar_select %p85, %s86, %s87
      %p91 = pneg %p85
      %p92 = scmp.eq.s32.totalorder %s13, 1
      %p93 = por %p91, %p92
      %p94 = scmp.ne.s32.totalorder %s86, %s89
      %p95 = scmp.eq.s32.totalorder %s13, 0
      %p96 = por %p94, %p95
      %p97 = scmp.ne.s32.totalorder %s86, %s89
      %p98 = scmp.eq.s32.totalorder %s18, 1
      %p99 = por %p97, %p98
      %p100 = scmp.ne.s32.totalorder %s89, %s90
      %p101 = scmp.eq.s32.totalorder %s18, 0
      %p102 = por %p100, %p101
      %p103 = scmp.ne.s32.totalorder %s89, %s90
      %p104 = scmp.eq.s32.totalorder %s19, 1
      %p105 = por %p103, %p104
      %p107 = scmp.ne.s32.totalorder %s90, %s106
      %p108 = scmp.eq.s32.totalorder %s19, 0
      %p109 = por %p107, %p108
      %s110 = ssub.s32 %s20, %s32
      %s111 = ssub.s32 %s21, %s28
      %s112 = sor.u32 %s110, %s111
      %p113 = scmp.eq.s32.totalorder %s112, 0
      %s115 = sadd.s32 %s114, 1
      %s116 = scalar_select %p113, %s114, %s115
      %p119 = pneg %p113
      %p120 = scmp.eq.s32.totalorder %s13, 1
      %p121 = por %p119, %p120
      %p122 = scmp.ne.s32.totalorder %s114, %s117
      %p123 = scmp.eq.s32.totalorder %s13, 0
      %p124 = por %p122, %p123
      %p125 = scmp.ne.s32.totalorder %s114, %s117
      %p126 = scmp.eq.s32.totalorder %s18, 1
      %p127 = por %p125, %p126
      %p128 = scmp.ne.s32.totalorder %s117, %s118
      %p129 = scmp.eq.s32.totalorder %s18, 0
      %p130 = por %p128, %p129
      %p131 = scmp.ne.s32.totalorder %s117, %s118
      %p132 = scmp.eq.s32.totalorder %s19, 1
      %p133 = por %p131, %p132
      %p135 = scmp.ne.s32.totalorder %s118, %s134
      %p136 = scmp.eq.s32.totalorder %s19, 0
      %p137 = por %p135, %p136
      %s138 = ssub.s32 %s20, %s32
      %p139 = scmp.eq.s32.totalorder %s138, 0
      %s141 = sadd.s32 %s140, 1
      %s142 = scalar_select %p139, %s140, %s141
      %p145 = pneg %p139
      %p146 = scmp.eq.s32.totalorder %s13, 1
      %p147 = por %p145, %p146
      %p148 = scmp.ne.s32.totalorder %s140, %s143
      %p149 = scmp.eq.s32.totalorder %s13, 0
      %p150 = por %p148, %p149
      %p151 = scmp.ne.s32.totalorder %s140, %s143
      %p152 = scmp.eq.s32.totalorder %s18, 1
      %p153 = por %p151, %p152
      %p154 = scmp.ne.s32.totalorder %s143, %s144
      %p155 = scmp.eq.s32.totalorder %s18, 0
      %p156 = por %p154, %p155
      %p157 = scmp.ne.s32.totalorder %s143, %s144
      %p158 = scmp.eq.s32.totalorder %s19, 1
      %p159 = por %p157, %p158
      %p161 = scmp.ne.s32.totalorder %s144, %s160
      %p162 = scmp.eq.s32.totalorder %s19, 0
      %p163 = por %p161, %p162
      %p164 = scmp.le.s32.totalorder 1, %s13
      %p165 = scmp.lt.s32.totalorder %s13, 3
      %p166 = pnand %p164, %p165
      %p167 = pneg %p166
      // Predicated region
      $region9: #{tpu_custom_call.1} parent=5 // pred_check
        _
      $region10: #{tpu_custom_call.1} parent=5 // pred_check_branch
        %169 = sbr.rel (%p166) target = $region12
      $region11: #{tpu_custom_call.1} parent=5 // pred_region
        %s170 = ssub.s32 %s13, 1
        // Predicated region
        $region13: #{tpu_custom_call.1} parent=11 // pred_check
          %p171 = pneg %p46
        $region14: #{tpu_custom_call.1} parent=11 // pred_check_branch
          %173 = sbr.rel (%p171) target = $region16
        $region15: #{tpu_custom_call.1} parent=11 // pred_region
          _
        $region16: #{tpu_custom_call.1} parent=11 // pred_fallthru
          _
      $region12: #{tpu_custom_call.1} parent=5 // pred_fallthru
        _
      %p174 = scmp.lt.s32.totalorder %s13, 2
      // Predicated region
      $region17: #{tpu_custom_call.1} parent=5 // pred_check
        %p175 = pneg %p174
      $region18: #{tpu_custom_call.1} parent=5 // pred_check_branch
        %177 = sbr.rel (%p175) target = $region20
      $region19: #{tpu_custom_call.1} parent=5 // pred_region
        // Predicated region
        $region21: #{tpu_custom_call.1} parent=19 // pred_check
          %p178 = pneg %p68
        $region22: #{tpu_custom_call.1} parent=19 // pred_check_branch
          %180 = sbr.rel (%p178) target = $region24
        $region23: #{tpu_custom_call.1} parent=19 // pred_region
          %s181 = smul.u32 2, %s21
          %p182 = scmp.lt.s32.totalorder %s20, 1
          %s183 = scalar_select %p182, %s20, 1
          %p184 = scmp.lt.s32.totalorder %s181, 1
          %s185 = scalar_select %p184, %s181, 1
          %s186 = smul.addr %s183, 2
          %s187 = sadd.s32 %s185, %s186
          %s188 = smul.addr %s187, 8
          %s189 = scalar_lea.vmem %s1, %s188
          %s190 = smul.u32 2, %s21
        $region24: #{tpu_custom_call.1} parent=19 // pred_fallthru
          _
        // Predicated region
        $region25: #{tpu_custom_call.1} parent=19 // pred_check
          %p191 = pneg %p96
        $region26: #{tpu_custom_call.1} parent=19 // pred_check_branch
          %193 = sbr.rel (%p191) target = $region28
        $region27: #{tpu_custom_call.1} parent=19 // pred_region
          %s194 = smul.u32 2, %s21
          %p195 = scmp.lt.s32.totalorder %s20, 1
          %s196 = scalar_select %p195, %s20, 1
          %p197 = scmp.lt.s32.totalorder %s194, 1
          %s198 = scalar_select %p197, %s194, 1
          %s199 = smul.addr %s196, 2
          %s200 = sadd.s32 %s198, %s199
          %s201 = smul.addr %s200, 4
          %s202 = scalar_lea.vmem %s2, %s201
          %s203 = smul.u32 2, %s21
        $region28: #{tpu_custom_call.1} parent=19 // pred_fallthru
          _
        // Predicated region
        $region29: #{tpu_custom_call.1} parent=19 // pred_check
          %p204 = pneg %p124
        $region30: #{tpu_custom_call.1} parent=19 // pred_check_branch
          %206 = sbr.rel (%p204) target = $region32
        $region31: #{tpu_custom_call.1} parent=19 // pred_region
          %s207 = smul.u32 2, %s21
          %p208 = scmp.lt.s32.totalorder %s20, 1
          %s209 = scalar_select %p208, %s20, 1
          %p210 = scmp.lt.s32.totalorder %s207, 1
          %s211 = scalar_select %p210, %s207, 1
          %s212 = smul.addr %s209, 2
          %s213 = sadd.s32 %s211, %s212
          %s214 = scalar_lea.vmem %s3, %s213
          %s215 = smul.u32 2, %s21
        $region32: #{tpu_custom_call.1} parent=19 // pred_fallthru
          _
      $region20: #{tpu_custom_call.1} parent=5 // pred_fallthru
        _
      %p216 = scmp.le.s32.totalorder 1, %s13
      %p217 = scmp.lt.s32.totalorder %s13, 3
      %p218 = pnand %p216, %p217
      %p219 = pneg %p218
      // Predicated region
      $region33: #{tpu_custom_call.1} parent=5 // pred_check
        _
      $region34: #{tpu_custom_call.1} parent=5 // pred_check_branch
        %221 = sbr.rel (%p218) target = $region36
      $region35: #{tpu_custom_call.1} parent=5 // pred_region
        %s222 = ssub.s32 %s13, 1
        %p223 = pneg %p46
        %p224 = pneg %p43
        %s225 = smul.u32 2, %s23
        %p226 = scmp.lt.s32.totalorder %s22, 1
        %s227 = scalar_select %p226, %s22, 1
        %p228 = scmp.lt.s32.totalorder %s225, 1
        %s229 = scalar_select %p228, %s225, 1
        %s230 = smul.addr %s227, 2
        %s231 = sadd.s32 %s229, %s230
        %s232 = smul.addr %s231, 8
        %s233 = scalar_lea.vmem %s1, %s232
        %p234 = pneg %p74
        %p235 = pneg %p71
        %s236 = smul.u32 2, %s23
        %p237 = scmp.lt.s32.totalorder %s22, 1
        %s238 = scalar_select %p237, %s22, 1
        %p239 = scmp.lt.s32.totalorder %s236, 1
        %s240 = scalar_select %p239, %s236, 1
        %s241 = smul.addr %s238, 2
        %s242 = sadd.s32 %s240, %s241
        %s243 = smul.addr %s242, 4
        %s244 = scalar_lea.vmem %s2, %s243
        %p245 = pneg %p102
        %p246 = pneg %p99
        %s247 = smul.u32 2, %s23
        %p248 = scmp.lt.s32.totalorder %s22, 1
        %s249 = scalar_select %p248, %s22, 1
        %p250 = scmp.lt.s32.totalorder %s247, 1
        %s251 = scalar_select %p250, %s247, 1
        %s252 = smul.addr %s249, 2
        %s253 = sadd.s32 %s251, %s252
        %s254 = scalar_lea.vmem %s3, %s253
        %p255 = pneg %p130
        %p256 = pneg %p127
        %p257 = pneg %p156
        %p258 = pneg %p153
        %s259 = sand.u32 %s143, 1
        %s260 = scalar_lea.sflag [#allocation3], %s259
        %s261 = sand.u32 %s143, 1
        %s262 = smul.addr %s261, 8
        %s263 = scalar_lea.vmem [#allocation2], %s262
        %s264 = smul.u32 2, %s23
        %p265 = scmp.lt.s32.totalorder %s22, 1
        %s266 = scalar_select %p265, %s22, 1
        %p267 = scmp.lt.s32.totalorder %s264, 1
        %s268 = scalar_select %p267, %s264, 1
        %s269 = smul.addr %s266, 2
        %s270 = sadd.s32 %s268, %s269
        %s271 = smul.addr %s270, 8
        %s272 = scalar_lea.vmem %s1, %s271
        %s273 = smul.u32 2, %s23
        %s274 = smul.u32 2, %s23
        %p275 = scmp.lt.s32.totalorder %s22, 1
        %s276 = scalar_select %p275, %s22, 1
        %p277 = scmp.lt.s32.totalorder %s274, 1
        %s278 = scalar_select %p277, %s274, 1
        %s279 = smul.addr %s276, 2
        %s280 = sadd.s32 %s278, %s279
        %s281 = smul.addr %s280, 4
        %s282 = scalar_lea.vmem %s2, %s281
        %s283 = smul.u32 2, %s23
        %s284 = smul.u32 2, %s23
        %p285 = scmp.lt.s32.totalorder %s22, 1
        %s286 = scalar_select %p285, %s22, 1
        %p287 = scmp.lt.s32.totalorder %s284, 1
        %s288 = scalar_select %p287, %s284, 1
        %s289 = smul.addr %s286, 2
        %s290 = sadd.s32 %s288, %s289
        %s291 = scalar_lea.vmem %s3, %s290
        %s292 = smul.u32 2, %s23
        %v293 = vld [vmem:[%s272] sm:$0x7f]
        %v294 = vld [vmem:[%s272 + $0x8] sm:$0x7f]
        %v295 = vmul.f32 %v293, 0.5
        %v296 = vmul.f32 %v294, 0.5
        %v299 = vrot.slane %v295, 3
        %v300 = vrot.slane %v296, 3
        %v303 = vsub.f32 %v293, %v299
        %v304 = vsub.f32 %v294, %v300
        %v305 = vadd.f32 %v293, %v299
        %v306 = vadd.f32 %v294, %v300
        %v307 = vsub.f32 %v305, %v303
        %v308 = vsub.f32 %v306, %v304
        %v311 = vrot.slane %v307, 1
        %v312 = vrot.slane %v308, 1
        %v315 = vmul.f32 %v307, %v311
        %v316 = vmul.f32 %v308, %v312
        %v317 = vsub.f32 0.0, %v305
        %v318 = vsub.f32 0.0, %v306
        %v321 = vrot.slane %v317, 6
        %v322 = vrot.slane %v318, 6
        %vm325 = vcmask 1041408
        %v326 = vsel %vm325, %v303, %v321
        %v327 = vsel %vm325, %v304, %v322
        %v328 = vld [vmem:[%s0] sm:$0x7f]
        %v329 = vld [vmem:[%s0 + $0x7] sm:$0xf]
        %v330 = vld [vmem:[%s0 + $0xb] sm:$0x1]
        %v331 = vld [vmem:[%s0 + $0xc] sm:$0x1]
        %v332 = vld [vmem:[%s0 + $0xd] sm:$0x1]
        %334 = vset.pattern.permute.xlu0 0
        %335 = vperm.xlu0 %334, %v329
        %v336 = vpop.permute.xlu0 %335
        %v338 = vmax.f32 %v326, %v336
        %v339 = vmax.f32 %v327, %v336
        %v342 = vrot.slane %v338, 2
        %v343 = vrot.slane %v339, 2
        %v346 = vadd.f32 %v338, %v342
        %v347 = vadd.f32 %v339, %v343
        %v348 = vsub.f32 0.0, %v346
        %v349 = vsub.f32 0.0, %v347
        %v350 = vmax.f32 %v348, 0.0
        %v351 = vmax.f32 %v349, 0.0
        %v354 = vrot.slane %v350, 1
        %v355 = vrot.slane %v351, 1
        %v358 = vmul.f32 %v350, %v354
        %v359 = vmul.f32 %v351, %v355
        %361 = vset.pattern.permute.xlu0 0
        %362 = vperm.xlu0 %361, %v330
        %v363 = vpop.permute.xlu0 %362
        %v365 = vadd.f32 %v315, %v363
        %v366 = vadd.f32 %v316, %v363
        %v367 = vsub.f32 %v365, %v358
        %v368 = vsub.f32 %v366, %v359
        %v369 = vadd.f32 %v367, 1e-06
        %v370 = vadd.f32 %v368, 1e-06
        %v371 = vrcp.pop %v369
        %v372 = vrcp.pop %v370
        %v373 = vmul.f32 %v358, %v371
        %v374 = vmul.f32 %v359, %v372
        %vm375 = vcmp.gt.f32.partialorder %v331, 0.5
        %v376 = vsel %vm375, 1, 0
        %377 = vset.pattern.permute.xlu0 0
        %378 = vperm.xlu0 %377, %v376
        %v379 = vpop.permute.xlu0 %378
        %vm380 = vcmp.eq.s32.totalorder %v379, 1
        %v381 = vsel %vm380, %v373, -1.0
        %v382 = vsel %vm380, %v374, -1.0
        %vm383 = vcmp.gt.f32.partialorder %v381, -1.0
        %vm384 = vcmp.gt.f32.partialorder %v382, -1.0
        %v385 = vsel %vm383, 1, 0
        %v386 = vsel %vm384, 1, 0
        %v387 = vlaneseq
        %v388 = vshrl.u32 %v387, 7
        %v389 = vsub.s32 0, %v388
        %v390 = vrot.slane %v385, %v389
        %v391 = vlaneseq
        %v392 = vshrl.u32 %v391, 7
        %v393 = vsub.s32 0, %v392
        %v394 = vrot.slane %v386, %v393
        %vm395 = vcmp.eq.s32.totalorder %v390, 1
        %vm396 = vcmp.eq.s32.totalorder %v394, 1
        %398 = vset.pattern.permute.xlu0 0
        %399 = vperm.xlu0 %398, %v328
        %v400 = vpop.permute.xlu0 %399
        %v402 = vsel %vm395, %v400, 0.0
        %v403 = vsel %vm396, %v400, 0.0
        %405 = vset.pattern.permute.xlu0 0
        %406 = vperm.xlu0 %405, %v332
        %v407 = vpop.permute.xlu0 %406
        %v409 = vsel %vm383, %v407, 0.0
        %v410 = vsel %vm384, %v407, 0.0
        %v411 = vsel %vm383, %v381, -1.0
        %v412 = vsel %vm384, %v382, -1.0
        %413 = vset.pattern.permute.xlu0 1
        %414 = vperm.xlu0 %413, %v329
        %v415 = vpop.permute.xlu0 %414
        %v417 = vmax.f32 %v326, %v415
        %v418 = vmax.f32 %v327, %v415
        %v421 = vrot.slane %v417, 2
        %v422 = vrot.slane %v418, 2
        %v425 = vadd.f32 %v417, %v421
        %v426 = vadd.f32 %v418, %v422
        %v427 = vsub.f32 0.0, %v425
        %v428 = vsub.f32 0.0, %v426
        %v429 = vmax.f32 %v427, 0.0
        %v430 = vmax.f32 %v428, 0.0
        %v433 = vrot.slane %v429, 1
        %v434 = vrot.slane %v430, 1
        %v437 = vmul.f32 %v429, %v433
        %v438 = vmul.f32 %v430, %v434
        %439 = vset.pattern.permute.xlu0 1
        %440 = vperm.xlu0 %439, %v330
        %v441 = vpop.permute.xlu0 %440
        %v443 = vadd.f32 %v315, %v441
        %v444 = vadd.f32 %v316, %v441
        %v445 = vsub.f32 %v443, %v437
        %v446 = vsub.f32 %v444, %v438
        %v447 = vadd.f32 %v445, 1e-06
        %v448 = vadd.f32 %v446, 1e-06
        %v449 = vrcp.pop %v447
        %v450 = vrcp.pop %v448
        %v451 = vmul.f32 %v437, %v449
        %v452 = vmul.f32 %v438, %v450
        %453 = vset.pattern.permute.xlu0 1
        %454 = vperm.xlu0 %453, %v376
        %v455 = vpop.permute.xlu0 %454
        %vm456 = vcmp.eq.s32.totalorder %v455, 1
        %v457 = vsel %vm456, %v451, -1.0
        %v458 = vsel %vm456, %v452, -1.0
        %vm459 = vcmp.gt.f32.partialorder %v457, %v411
        %vm460 = vcmp.gt.f32.partialorder %v458, %v412
        %v461 = vsel %vm459, 1, 0
        %v462 = vsel %vm460, 1, 0
        %v463 = vlaneseq
        %v464 = vshrl.u32 %v463, 7
        %v465 = vsub.s32 0, %v464
        %v466 = vrot.slane %v461, %v465
        %v467 = vlaneseq
        %v468 = vshrl.u32 %v467, 7
        %v469 = vsub.s32 0, %v468
        %v470 = vrot.slane %v462, %v469
        %vm471 = vcmp.eq.s32.totalorder %v466, 1
        %vm472 = vcmp.eq.s32.totalorder %v470, 1
        %473 = vset.pattern.permute.xlu0 1
        %474 = vperm.xlu0 %473, %v328
        %v475 = vpop.permute.xlu0 %474
        %v477 = vsel %vm471, %v475, %v402
        %v478 = vsel %vm472, %v475, %v403
        %479 = vset.pattern.permute.xlu0 1
        %480 = vperm.xlu0 %479, %v332
        %v481 = vpop.permute.xlu0 %480
        %v483 = vsel %vm459, %v481, %v409
        %v484 = vsel %vm460, %v481, %v410
        %v485 = vsel %vm459, %v457, %v411
        %v486 = vsel %vm460, %v458, %v412
        %487 = vset.pattern.permute.xlu0 2
        %488 = vperm.xlu0 %487, %v329
        %v489 = vpop.permute.xlu0 %488
        %v491 = vmax.f32 %v326, %v489
        %v492 = vmax.f32 %v327, %v489
        %v495 = vrot.slane %v491, 2
        %v496 = vrot.slane %v492, 2
        %v499 = vadd.f32 %v491, %v495
        %v500 = vadd.f32 %v492, %v496
        %v501 = vsub.f32 0.0, %v499
        %v502 = vsub.f32 0.0, %v500
        %v503 = vmax.f32 %v501, 0.0
        %v504 = vmax.f32 %v502, 0.0
        %v507 = vrot.slane %v503, 1
        %v508 = vrot.slane %v504, 1
        %v511 = vmul.f32 %v503, %v507
        %v512 = vmul.f32 %v504, %v508
        %513 = vset.pattern.permute.xlu0 2
        %514 = vperm.xlu0 %513, %v330
        %v515 = vpop.permute.xlu0 %514
        %v517 = vadd.f32 %v315, %v515
        %v518 = vadd.f32 %v316, %v515
        %v519 = vsub.f32 %v517, %v511
        %v520 = vsub.f32 %v518, %v512
        %v521 = vadd.f32 %v519, 1e-06
        %v522 = vadd.f32 %v520, 1e-06
        %v523 = vrcp.pop %v521
        %v524 = vrcp.pop %v522
        %v525 = vmul.f32 %v511, %v523
        %v526 = vmul.f32 %v512, %v524
        %527 = vset.pattern.permute.xlu0 2
        %528 = vperm.xlu0 %527, %v376
        %v529 = vpop.permute.xlu0 %528
        %vm530 = vcmp.eq.s32.totalorder %v529, 1
        %v531 = vsel %vm530, %v525, -1.0
        %v532 = vsel %vm530, %v526, -1.0
        %vm533 = vcmp.gt.f32.partialorder %v531, %v485
        %vm534 = vcmp.gt.f32.partialorder %v532, %v486
        %v535 = vsel %vm533, 1, 0
        %v536 = vsel %vm534, 1, 0
        %v537 = vlaneseq
        %v538 = vshrl.u32 %v537, 7
        %v539 = vsub.s32 0, %v538
        %v540 = vrot.slane %v535, %v539
        %v541 = vlaneseq
        %v542 = vshrl.u32 %v541, 7
        %v543 = vsub.s32 0, %v542
        %v544 = vrot.slane %v536, %v543
        %vm545 = vcmp.eq.s32.totalorder %v540, 1
        %vm546 = vcmp.eq.s32.totalorder %v544, 1
        %547 = vset.pattern.permute.xlu0 2
        %548 = vperm.xlu0 %547, %v328
        %v549 = vpop.permute.xlu0 %548
        %v551 = vsel %vm545, %v549, %v477
        %v552 = vsel %vm546, %v549, %v478
        %553 = vset.pattern.permute.xlu0 2
        %554 = vperm.xlu0 %553, %v332
        %v555 = vpop.permute.xlu0 %554
        %v557 = vsel %vm533, %v555, %v483
        %v558 = vsel %vm534, %v555, %v484
        %v559 = vsel %vm533, %v531, %v485
        %v560 = vsel %vm534, %v532, %v486
        %vm561 = vcmp.ge.f32.partialorder %v559, 0.6
        %vm562 = vcmp.ge.f32.partialorder %v560, 0.6
        %v563 = vsel %vm561, 1, 0
        %v564 = vsel %vm562, 1, 0
        %v565 = vcvt.s32.f32 %v563
        %v566 = vcvt.s32.f32 %v564
        %vm567 = vcmp.le.f32.partialorder %v559, 0.4
        %vm568 = vcmp.le.f32.partialorder %v560, 0.4
        %v569 = vsel %vm567, 1, 0
        %v570 = vsel %vm568, 1, 0
        %v571 = vcvt.s32.f32 %v569
        %v572 = vcvt.s32.f32 %v570
        %v573 = vmax.f32 %v565, %v571
        %v574 = vmax.f32 %v566, %v572
        %v575 = vld [vmem:[%s282] sm:$0xff]
        %v576 = vlaneseq
        %v577 = vshrl.u32 %v576, 7
        %v578 = vcvt.s32.f32 %v577
        %v579 = vlaneseq
        %v580 = vshrl.u32 %v579, 7
        %v581 = vsub.s32 0, %v580
        %v582 = vrot.slane %v557, %v581
        %v583 = vlaneseq
        %v584 = vshrl.u32 %v583, 7
        %v585 = vsub.s32 0, %v584
        %v586 = vrot.slane %v558, %v585
        %vm587 = vcmp.eq.f32.partialorder %v578, %v582
        %vm588 = vcmp.eq.f32.partialorder %v578, %v586
        %v589 = vsel %vm587, 1, 0
        %v590 = vsel %vm588, 1, 0
        %v591 = vcvt.s32.f32 %v589
        %v592 = vcvt.s32.f32 %v590
        %v593 = vlaneseq
        %v594 = vshrl.u32 %v593, 7
        %v595 = vsub.s32 0, %v594
        %v596 = vrot.slane %v565, %v595
        %v597 = vlaneseq
        %v598 = vshrl.u32 %v597, 7
        %v599 = vsub.s32 0, %v598
        %v600 = vrot.slane %v566, %v599
        %v601 = vmul.f32 %v591, %v596
        %v602 = vmul.f32 %v592, %v600
        %v603 = vand.u32 2147483647, %v575
        %v604 = vsub.f32 0.0, %v603
        %v605 = vmul.f32 %v604, 1.442695
        %v606 = vpow.pop %v605
        %v607 = vadd.f32 %v606, 1.0
        %v608 = vrcp.pop %v607
        %v609 = vmax.f32 %v575, 0.0
        %v612 = vcombine.low %v601, %v602
        %v614 = vmul.f32 %v575, %v612
        %v615 = vsub.f32 %v609, %v614
        %v616 = vlog2.pop %v607
        %v617 = vmul.f32 %v616, 0.6931472
        %v618 = vadd.f32 %v615, %v617
        %vm619 = vcmp.ge.f32.partialorder %v575, 0.0
        %v620 = vmul.f32 %v606, %v608
        %v621 = vsel %vm619, %v608, %v620
        %vm622 = vcmp.eq.f32.partialorder %v601, 1.0
        %vm623 = vcmp.eq.f32.partialorder %v602, 1.0
        %v624 = vsub.f32 1.0, %v621
        %v626 = vcombine.high %v621, %v621
        %v629 = vcombine.high %v624, %v624
        %v631 = vsel %vm622, %v621, %v624
        %v632 = vsel %vm623, %v626, %v629
        %v633 = vsel %vm622, 0.25, 0.75
        %v634 = vsel %vm623, 0.25, 0.75
        %v635 = vsub.f32 1.0, %v631
        %v636 = vsub.f32 1.0, %v632
        %v637 = vmul.f32 %v635, %v635
        %v638 = vmul.f32 %v636, %v636
        %v639 = vmul.f32 %v633, %v637
        %v640 = vmul.f32 %v634, %v638
        %v642 = vcombine.high %v618, %v618
        %v644 = vmul.f32 %v639, %v618
        %v645 = vmul.f32 %v640, %v642
        %v646 = vlaneseq
        %v647 = vshrl.u32 %v646, 7
        %v648 = vsub.s32 0, %v647
        %v649 = vrot.slane %v573, %v648
        %v650 = vlaneseq
        %v651 = vshrl.u32 %v650, 7
        %v652 = vsub.s32 0, %v651
        %v653 = vrot.slane %v574, %v652
        %v654 = vmul.f32 %v644, %v649
        %v655 = vmul.f32 %v645, %v653
        %vm656 = vcmask 1043456
        %v657 = vsel %vm656, %v654, 0.0
        %v658 = vsel %vm656, %v655, 0.0
        %v659 = vadd.f32 %v657, %v658
        %660 = vadd.xlane.f32.xlu0 %v659
        %v661 = vpop.xlane.xlu0 %660
        %v662 = vrot.slane %v661, 4
        %v663 = vadd.f32 %v661, %v662
        %v664 = vrot.slane %v663, 2
        %v665 = vadd.f32 %v663, %v664
        %v666 = vrot.slane %v665, 1
        %v667 = vadd.f32 %v665, %v666
        %s668 = vtos %v667
        %vm669 = vcmask 1040384
        %v670 = vsel %vm669, %v573, 0.0
        %v671 = vsel %vm669, %v574, 0.0
        %v672 = vadd.f32 %v670, %v671
        %673 = vadd.xlane.f32.xlu0 %v672
        %v674 = vpop.xlane.xlu0 %673
        %v675 = vrot.slane %v674, 4
        %v676 = vadd.f32 %v674, %v675
        %v677 = vrot.slane %v676, 2
        %v678 = vadd.f32 %v676, %v677
        %v679 = vrot.slane %v678, 1
        %v680 = vadd.f32 %v678, %v679
        %s681 = vtos %v680
        %v682 = vsub.f32 %v293, %v551
        %v683 = vsub.f32 %v294, %v552
        %v684 = vand.u32 2147483647, %v682
        %v685 = vand.u32 2147483647, %v683
        %vm686 = vcmp.lt.f32.partialorder %v684, 1.0
        %vm687 = vcmp.lt.f32.partialorder %v685, 1.0
        %v688 = vmul.f32 %v682, 0.5
        %v689 = vmul.f32 %v683, 0.5
        %v690 = vmul.f32 %v688, %v682
        %v691 = vmul.f32 %v689, %v683
        %v692 = vsub.f32 %v684, 0.5
        %v693 = vsub.f32 %v685, 0.5
        %v694 = vsel %vm686, %v690, %v692
        %v695 = vsel %vm687, %v691, %v693
        %v696 = vmul.f32 %v694, %v596
        %v697 = vmul.f32 %v695, %v600
        %vm698 = vcmask 1046528
        %v699 = vsel %vm698, %v696, 0.0
        %v700 = vsel %vm698, %v697, 0.0
        %v701 = vadd.f32 %v699, %v700
        %702 = vadd.xlane.f32.xlu0 %v701
        %v703 = vpop.xlane.xlu0 %702
        %v704 = vrot.slane %v703, 4
        %v705 = vadd.f32 %v703, %v704
        %v706 = vrot.slane %v705, 2
        %v707 = vadd.f32 %v705, %v706
        %v708 = vrot.slane %v707, 1
        %v709 = vadd.f32 %v707, %v708
        %s710 = vtos %v709
        %v711 = vsel %vm669, %v565, 0.0
        %v712 = vsel %vm669, %v566, 0.0
        %v713 = vadd.f32 %v711, %v712
        %714 = vadd.xlane.f32.xlu0 %v713
        %v715 = vpop.xlane.xlu0 %714
        %v716 = vrot.slane %v715, 4
        %v717 = vadd.f32 %v715, %v716
        %v718 = vrot.slane %v717, 2
        %v719 = vadd.f32 %v717, %v718
        %v720 = vrot.slane %v719, 1
        %v721 = vadd.f32 %v719, %v720
        %s722 = vtos %v721
        %v723 = vld [vmem:[%s291] sm:$0x3]
        %v724 = vand.u32 2147483647, %v723
        %v725 = vsub.f32 0.0, %v724
        %v726 = vmul.f32 %v725, 1.442695
        %v727 = vpow.pop %v726
        %v728 = vmax.f32 %v723, 0.0
        %v731 = vcombine.low %v565, %v566
        %v733 = vunpack.c.l.s4 1966171168
        %v734 = vunpack.c.0.s8 %v733
        %v735 = vlaneseq
        %v736 = vshrl.u32 %v735, 7
        %v737 = vsub.s32 %v734, %v736
        %v738 = vrot.slane %v731, %v737
        %v740 = vunpack.c.l.s4 1966171168
        %v741 = vunpack.c.0.s8 %v740
        %v742 = vlaneseq
        %v743 = vshrl.u32 %v742, 7
        %v744 = vsub.s32 %v741, %v743
        %v745 = vrot.slane %v738, %v744
        %v747 = vmul.f32 %v723, %v745
        %v748 = vsub.f32 %v728, %v747
        %v749 = vadd.f32 %v727, 1.0
        %v750 = vlog2.pop %v749
        %v751 = vmul.f32 %v750, 0.6931472
        %v752 = vadd.f32 %v748, %v751
        %v755 = vcombine.low %v573, %v574
        %v757 = vunpack.c.l.s4 1966171168
        %v758 = vunpack.c.0.s8 %v757
        %v759 = vlaneseq
        %v760 = vshrl.u32 %v759, 7
        %v761 = vsub.s32 %v758, %v760
        %v762 = vrot.slane %v755, %v761
        %v764 = vunpack.c.l.s4 1966171168
        %v765 = vunpack.c.0.s8 %v764
        %v766 = vlaneseq
        %v767 = vshrl.u32 %v766, 7
        %v768 = vsub.s32 %v765, %v767
        %v769 = vrot.slane %v762, %v768
        %v771 = vmul.f32 %v752, %v769
        %v773 = vlaneseq
        %v774 = vshrl.u32 %v773, 7
        %v775 = vsub.s32 0, %v774
        %v776 = vrot.slane %v771, %v775
        %v777 = vlaneseq
        %v778 = vshrl.u32 %v777, 7
        %v779 = vsub.s32 1, %v778
        %v780 = vrot.slane %v771, %v779
        %v783 = vsel %vm669, %v776, 0.0
        %v784 = vsel %vm669, %v780, 0.0
        %v785 = vadd.f32 %v783, %v784
        %786 = vadd.xlane.f32.xlu0 %v785
        %v787 = vpop.xlane.xlu0 %786
        %v788 = vrot.slane %v787, 4
        %v789 = vadd.f32 %v787, %v788
        %v790 = vrot.slane %v789, 2
        %v791 = vadd.f32 %v789, %v790
        %v792 = vrot.slane %v791, 1
        %v793 = vadd.f32 %v791, %v792
        %s794 = vtos %v793
        %vm795 = vcmp.eq.s32.totalorder %v577, 0
        %v796 = vstv %s668
        %v797 = vsel %vm795, %v796, 0.0
        %vm798 = vcmp.eq.s32.totalorder %v577, 1
        %v799 = vstv %s681
        %v800 = vsel %vm798, %v799, 0.0
        %v801 = vadd.f32 %v797, %v800
        %vm802 = vcmp.eq.s32.totalorder %v577, 2
        %v803 = vstv %s710
        %v804 = vsel %vm802, %v803, 0.0
        %v805 = vadd.f32 %v801, %v804
        %vm806 = vcmp.eq.s32.totalorder %v577, 3
        %v807 = vstv %s722
        %v808 = vsel %vm806, %v807, 0.0
        %v809 = vadd.f32 %v805, %v808
        %vm810 = vcmp.eq.s32.totalorder %v577, 4
        %v811 = vstv %s794
        %v812 = vsel %vm810, %v811, 0.0
        %v813 = vadd.f32 %v809, %v812
        %p814 = scmp.eq.s32.totalorder %s23, 0
        // Predicated region
        $region37: #{tpu_custom_call.1} parent=35 // pred_check
          %p815 = pneg %p814
        $region38: #{tpu_custom_call.1} parent=35 // pred_check_branch
          %817 = sbr.rel (%p815) target = $region40
        $region39: #{tpu_custom_call.1} parent=35 // pred_region
          %818 = vst [vmem:[%s263] sm:$0xff] 0.0
        $region40: #{tpu_custom_call.1} parent=35 // pred_fallthru
          _
        %v819 = vld [vmem:[%s263] sm:$0xff]
        %v820 = vadd.f32 %v819, %v813
        %821 = vst [vmem:[%s263] sm:$0xff] %v820
        %s822 = sand.u32 %s143, 1
        %s823 = scalar_lea.sflag [#allocation3], %s822
        %s824 = sand.u32 %s143, 1
        %s825 = smul.addr %s824, 8
        %s826 = scalar_lea.vmem [#allocation2], %s825
        // Predicated region
        $region41: #{tpu_custom_call.1} parent=35 // pred_check
          %p827 = pneg %p153
        $region42: #{tpu_custom_call.1} parent=35 // pred_check_branch
          %829 = sbr.rel (%p827) target = $region44
        $region43: #{tpu_custom_call.1} parent=35 // pred_region
          %s831 = ssub.s32 128, 128
          %832 = vsyncadd %s823, %s831
          %s833 = smul.addr %s22, 128
          %s834 = scalar_lea.hbm %s4, %s833
          %s836 = sshll.u32 %s826, 4
          %s837 = int_to_ptr.vmem [resolvable:$true] %s836
          %839 = dma.vmem_to_hbm [thread:$0]  %s837, 128, %s834, %s823
        $region44: #{tpu_custom_call.1} parent=35 // pred_fallthru
          _
      $region36: #{tpu_custom_call.1} parent=5 // pred_fallthru
        _
      %p840 = scmp.le.s32.totalorder 2, %s13
      // Predicated region
      $region45: #{tpu_custom_call.1} parent=5 // pred_check
        %p841 = pneg %p840
      $region46: #{tpu_custom_call.1} parent=5 // pred_check_branch
        %843 = sbr.rel (%p841) target = $region48
      $region47: #{tpu_custom_call.1} parent=5 // pred_region
        %s844 = ssub.s32 %s13, 2
        // Predicated region
        $region49: #{tpu_custom_call.1} parent=47 // pred_check
          %p845 = pneg %p159
        $region50: #{tpu_custom_call.1} parent=47 // pred_check_branch
          %847 = sbr.rel (%p845) target = $region52
        $region51: #{tpu_custom_call.1} parent=47 // pred_region
          %s848 = sand.u32 %s144, 1
          %s849 = scalar_lea.sflag [#allocation3], %s848
          %s850 = sand.u32 %s144, 1
          %s851 = smul.addr %s850, 8
          %s852 = scalar_lea.vmem [#allocation2], %s851
          %853 = dma.done %s849, 128
        $region52: #{tpu_custom_call.1} parent=47 // pred_fallthru
          _
      $region48: #{tpu_custom_call.1} parent=5 // pred_fallthru
        _
    $region6: #{tpu_custom_call.1} parent=1 // loop_footer
      %s17 = sadd.s32 1, %s13
    $region7: #{tpu_custom_call.1} parent=1 // loop_footer_branch
      %12 = sbr.rel target = $region3
    $region8: #{tpu_custom_call.1} parent=1 // loop_exit
      _
    %854 = vsyncpa [#allocation3], 1
    %s855 = scalar_lea.sflag [#allocation3], 1
    %856 = vsyncpa %s855, 1

</llo_original>
